<compile_context>
chip_gen: v6e
topology: v6e:2x2x1
jax: 0.10.0
libtpu: 0.0.40
codegen_flags: <defaults>
</compile_context>

<pallas_src>
import functools

import jax
import jax.numpy as jnp
import numpy as np
from jax.experimental import pallas as pl
from jax.experimental.pallas import tpu as pltpu

HIDDEN = 100        # logical hidden width (matches the PyTorch module)
HIDDEN_PAD = 128    # padded to a full lane tile
_HIGHEST = jax.lax.Precision.HIGHEST


def _head_layout(action_dim):
    """Return (out_pad, n_groups): lane-dense combined head width, and how many batch rows
    get packed into each 128-lane output row (power of two, capped at 16)."""
    w = 2 * action_dim
    out_pad = 128 if w <= 128 else ((w + 127) // 128) * 128
    g = 1
    while out_pad == 128 and (2 * g) * w <= 128 and 2 * g <= 16:
        g *= 2
    return out_pad, g


def _mlp_rotation_kernel(a_dim, n_groups, x_ref, w1_ref, b1_ref, wh_ref, bh_ref, out_ref):
    # fc1 + ReLU  (x: (TB, S) f32, w1: (S, 128) -- padded cols are zero so ReLU(0)=0)
    h = jnp.dot(x_ref[...], w1_ref[...],
                preferred_element_type=jnp.float32, precision=_HIGHEST) + b1_ref[...]
    h = jnp.maximum(h, 0.0)

    # fused, group-replicated heads: one (TB,128) @ (128,OUT) MXU pass.  Every 2A-lane group
    # holds the same [mean logits | std logits] for that row (padded rows of wh are zero).
    y = jnp.dot(h, wh_ref[...],
                preferred_element_type=jnp.float32, precision=_HIGHEST) + bh_ref[...]

    # Epilogue on all lanes (padded lanes are free filler under the memory bound -- do not narrow).
    width = 2 * a_dim
    lane = jax.lax.broadcasted_iota(jnp.int32, y.shape, 1)
    is_mean = (lane % width) < a_dim
    mean_v = jnp.tanh(y)
    # numerically stable softplus (+ 1e-5 offset)
    sp = jnp.maximum(y, 0.0) + jnp.log1p(jnp.exp(-jnp.abs(y))) + 1e-5
    combined = jnp.where(is_mean, mean_v, sp)

    # Pack n_groups row-chunks into the 128 output lanes:
    #   out[r, g*2A:(g+1)*2A] = [mean|std] of batch row g*chunk + r
    # -> dense (TB/G, OUT) writeback: G x fewer HBM write bytes, still an unmasked lane-dense vst.
    chunk, out_w = out_ref.shape
    out_lane = jax.lax.broadcasted_iota(jnp.int32, (chunk, out_w), 1)
    acc = jnp.zeros((chunk, out_w), jnp.float32)
    for g in range(n_groups):
        grp = combined[g * chunk:(g + 1) * chunk, :]               # contiguous sublane slice
        in_group = (out_lane >= g * width) & (out_lane < (g + 1) * width)
        acc = jnp.where(in_group, grp, acc)
    out_ref[...] = acc.astype(out_ref.dtype)


def pack_params(params, action_dim):
    """Pad hidden 100->128 and build the fused, group-replicated head weight/bias.
    Done once, outside the forward path.  Padded rows/cols are exactly zero."""
    w1, b1 = params["w1"], params["b1"]      # (S, 100), (1, 100)
    wm, bm = params["wm"], params["bm"]      # (100, A), (1, A)
    ws, bs = params["ws"], params["bs"]
    S = w1.shape[0]
    A = action_dim
    W = 2 * A
    out_pad, G = _head_layout(A)

    w1p = jnp.zeros((S, HIDDEN_PAD), jnp.float32).at[:, :HIDDEN].set(w1)
    b1p = jnp.zeros((1, HIDDEN_PAD), jnp.float32).at[:, :HIDDEN].set(b1)

    wh = jnp.zeros((HIDDEN_PAD, out_pad), jnp.float32)
    bh = jnp.zeros((1, out_pad), jnp.float32)
    for g in range(G):                       # replicate [wm | ws] into every lane group
        off = g * W
        wh = wh.at[:HIDDEN, off:off + A].set(wm).at[:HIDDEN, off + A:off + W].set(ws)
        bh = bh.at[:, off:off + A].set(bm).at[:, off + A:off + W].set(bs)

    return {"w1": w1p, "b1": b1p, "wh": wh, "bh": bh}


def mlp_rotation_forward(x, packed, action_dim, batch_tile=2048):
    """x: (B, state_dim) f32. packed: output of pack_params. Returns (mean, std), each (B, A)."""
    B, S = x.shape
    A = action_dim
    W = 2 * A
    out_pad, G = _head_layout(A)
    row_align = 8 * G                      # keeps chunk = TB // G a multiple of 8 sublanes

    # Evenly sized tiles; even tile count for large B so v7x's two TensorCores both get work.
    if B > batch_tile:
        n_tiles = 2 * pl.cdiv(B, 2 * batch_tile)
    else:
        n_tiles = 1
    TB = ((pl.cdiv(B, n_tiles) + row_align - 1) // row_align) * row_align
    B_pad = n_tiles * TB
    if B_pad != B:
        x = jnp.pad(x, ((0, B_pad - B), (0, 0)))
    chunk = TB // G

    out = pl.pallas_call(
        functools.partial(_mlp_rotation_kernel, A, G),
        out_shape=jax.ShapeDtypeStruct((n_tiles * chunk, out_pad), jnp.float32),
        grid=(n_tiles,),
        in_specs=[
            pl.BlockSpec((TB, S), lambda i: (i, 0)),                # x tile (streams over batch)
            pl.BlockSpec((S, HIDDEN_PAD), lambda i: (0, 0)),        # w1 (resident)
            pl.BlockSpec((1, HIDDEN_PAD), lambda i: (0, 0)),        # b1 (resident)
            pl.BlockSpec((HIDDEN_PAD, out_pad), lambda i: (0, 0)),  # fused/replicated head weight
            pl.BlockSpec((1, out_pad), lambda i: (0, 0)),           # fused/replicated head bias
        ],
        out_specs=pl.BlockSpec((chunk, out_pad), lambda i: (i, 0)), # packed, fully dense slab
        compiler_params=pltpu.CompilerParams(dimension_semantics=("parallel",)),
    )(x, packed["w1"], packed["b1"], packed["wh"], packed["bh"])

    # Unpack (cheap: operates on the already-dense packed data only):
    #   out[t*chunk + r, g*W:(g+1)*W]  ==  row t*TB + g*chunk + r  ->  [mean | std]
    y = out[:, :G * W].reshape(n_tiles, chunk, G, W)
    y = jnp.transpose(y, (0, 2, 1, 3)).reshape(B_pad, W)
    mean = y[:B, :A]
    std = y[:B, A:W]
    return mean, std


def init_params(key, state_dim, action_dim, hidden=HIDDEN):
    """Logical (unpadded) params with PyTorch-like init (kaiming/xavier normal weights,
    default uniform biases). Weights stored transposed: (in, out) so y = x @ W + b."""
    k1, k2, k3, kb1, kb2, kb3 = jax.random.split(key, 6)

    std1 = np.sqrt(2.0 / state_dim)                 # kaiming_normal_, fan_in = state_dim
    w1 = std1 * jax.random.normal(k1, (state_dim, hidden), jnp.float32)

    stdx = np.sqrt(2.0 / (hidden + action_dim))     # xavier_normal_
    wm = stdx * jax.random.normal(k2, (hidden, action_dim), jnp.float32)
    ws = stdx * jax.random.normal(k3, (hidden, action_dim), jnp.float32)

    bnd1 = 1.0 / np.sqrt(state_dim)
    bndh = 1.0 / np.sqrt(hidden)
    b1 = jax.random.uniform(kb1, (1, hidden), jnp.float32, -bnd1, bnd1)
    bm = jax.random.uniform(kb2, (1, action_dim), jnp.float32, -bndh, bndh)
    bs = jax.random.uniform(kb3, (1, action_dim), jnp.float32, -bndh, bndh)

    return {"w1": w1, "b1": b1, "wm": wm, "bm": bm, "ws": ws, "bs": bs}


def _reference_forward(x, params):
    h = jnp.maximum(jnp.dot(x, params["w1"], precision=_HIGHEST) + params["b1"], 0.0)
    mean = jnp.tanh(jnp.dot(h, params["wm"], precision=_HIGHEST) + params["bm"])
    std = jax.nn.softplus(jnp.dot(h, params["ws"], precision=_HIGHEST) + params["bs"]) + 1e-5
    return mean, std


if __name__ == "__main__":
    # TODO(synk): choose_action's Normal(mean, std).sample() lives outside forward(); not ported.
    state_dim, action_dim = 32, 8

    key = jax.random.PRNGKey(0)
    kx, kp, kx2 = jax.random.split(key, 3)
    params = init_params(kp, state_dim, action_dim)
    packed = pack_params(params, action_dim)          # one-time pad + head fusion/replication

    # small single-tile case
    x = jax.random.normal(kx, (2, state_dim), jnp.float32)
    mean, std = mlp_rotation_forward(x, packed, action_dim)
    jax.block_until_ready((mean, std))
    mean_ref, std_ref = _reference_forward(x, params)
    np.testing.assert_allclose(np.asarray(mean), np.asarray(mean_ref), rtol=1e-5, atol=1e-5)
    np.testing.assert_allclose(np.asarray(std), np.asarray(std_ref), rtol=1e-5, atol=1e-5)

    # multi-tile case (small batch_tile override just to exercise the even-tile grid + packing)
    x2 = jax.random.normal(kx2, (200, state_dim), jnp.float32)
    mean2, std2 = mlp_rotation_forward(x2, packed, action_dim, batch_tile=64)
    jax.block_until_ready((mean2, std2))
    mean2_ref, std2_ref = _reference_forward(x2, params)
    np.testing.assert_allclose(np.asarray(mean2), np.asarray(mean2_ref), rtol=1e-5, atol=1e-5)
    np.testing.assert_allclose(np.asarray(std2), np.asarray(std2_ref), rtol=1e-5, atol=1e-5)

    print("KERNEL_OK")
</pallas_src>

<mosaic_0001>
module attributes {stable_mosaic.version = 11 : i64} {
  func.func @_mlp_rotation_kernel(%arg0: i32, %arg1: memref<64x32xf32, #tpu.memory_space<vmem>>, %arg2: memref<32x128xf32, #tpu.memory_space<vmem>>, %arg3: memref<1x128xf32, #tpu.memory_space<vmem>>, %arg4: memref<128x128xf32, #tpu.memory_space<vmem>>, %arg5: memref<1x128xf32, #tpu.memory_space<vmem>>, %arg6: memref<8x128xf32, #tpu.memory_space<vmem>>) attributes {dimension_semantics = [#tpu.dimension_semantics<parallel>], iteration_bounds = array<i64: 1>, scalar_prefetch = 0 : i64, scratch_operands = 0 : i64, tpu.core_type = #tpu.core_type<tc>, window_params = [{transform_indices = @transform_0, window_bounds = array<i64: 64, 32>}, {pipeline_mode = #tpu.pipeline_mode<synchronous>, transform_indices = @transform_1, window_bounds = array<i64: 32, 128>}, {pipeline_mode = #tpu.pipeline_mode<synchronous>, transform_indices = @transform_2, window_bounds = array<i64: 1, 128>}, {pipeline_mode = #tpu.pipeline_mode<synchronous>, transform_indices = @transform_3, window_bounds = array<i64: 128, 128>}, {pipeline_mode = #tpu.pipeline_mode<synchronous>, transform_indices = @transform_4, window_bounds = array<i64: 1, 128>}, {transform_indices = @transform_5, window_bounds = array<i64: 8, 128>}]} {
    %c0 = arith.constant 0 : index
    %c0_0 = arith.constant 0 : index
    %0 = vector.load %arg1[%c0, %c0_0] : memref<64x32xf32, #tpu.memory_space<vmem>>, vector<64x32xf32>
    %c0_1 = arith.constant 0 : index
    %c0_2 = arith.constant 0 : index
    %1 = vector.load %arg2[%c0_1, %c0_2] : memref<32x128xf32, #tpu.memory_space<vmem>>, vector<32x128xf32>
    %cst = arith.constant dense<0.000000e+00> : vector<64x128xf32>
    %2 = tpu.matmul %0, %1, %cst {dimension_numbers = #tpu.dot_dimension_numbers<[1], [0], [0], [1], [0, 0, 1, 1], [], []>, precision = #tpu.contract_precision<fp32>} : vector<64x32xf32>, vector<32x128xf32>, vector<64x128xf32> -> vector<64x128xf32>
    %c0_3 = arith.constant 0 : index
    %c0_4 = arith.constant 0 : index
    %3 = vector.load %arg3[%c0_3, %c0_4] : memref<1x128xf32, #tpu.memory_space<vmem>>, vector<1x128xf32>
    %4 = vector.broadcast %3 : vector<1x128xf32> to vector<64x128xf32>
    %5 = arith.addf %2, %4 : vector<64x128xf32>
    %cst_5 = arith.constant 0.000000e+00 : f32
    %6 = vector.broadcast %cst_5 : f32 to vector<64x128xf32>
    %7 = arith.maximumf %5, %6 : vector<64x128xf32>
    %c0_6 = arith.constant 0 : index
    %c0_7 = arith.constant 0 : index
    %8 = vector.load %arg4[%c0_6, %c0_7] : memref<128x128xf32, #tpu.memory_space<vmem>>, vector<128x128xf32>
    %cst_8 = arith.constant dense<0.000000e+00> : vector<64x128xf32>
    %9 = tpu.matmul %7, %8, %cst_8 {dimension_numbers = #tpu.dot_dimension_numbers<[1], [0], [0], [1], [0, 0, 1, 1], [], []>, precision = #tpu.contract_precision<fp32>} : vector<64x128xf32>, vector<128x128xf32>, vector<64x128xf32> -> vector<64x128xf32>
    %c0_9 = arith.constant 0 : index
    %c0_10 = arith.constant 0 : index
    %10 = vector.load %arg5[%c0_9, %c0_10] : memref<1x128xf32, #tpu.memory_space<vmem>>, vector<1x128xf32>
    %11 = vector.broadcast %10 : vector<1x128xf32> to vector<64x128xf32>
    %12 = arith.addf %9, %11 : vector<64x128xf32>
    %13 = tpu.iota {dimensions = array<i32: 1>} : vector<64x128xi32>
    %c16_i32 = arith.constant 16 : i32
    %c0_i32 = arith.constant 0 : i32
    %14 = arith.cmpi eq, %c16_i32, %c0_i32 : i32
    %c1_i32 = arith.constant 1 : i32
    %15 = arith.select %14, %c1_i32, %c16_i32 : i32
    %16 = vector.broadcast %15 : i32 to vector<64x128xi32>
    %17 = arith.remsi %13, %16 : vector<64x128xi32>
    %c0_i32_11 = arith.constant 0 : i32
    %18 = vector.broadcast %c0_i32_11 : i32 to vector<64x128xi32>
    %19 = arith.cmpi ne, %17, %18 : vector<64x128xi32>
    %c0_i32_12 = arith.constant 0 : i32
    %20 = vector.broadcast %c0_i32_12 : i32 to vector<64x128xi32>
    %21 = arith.cmpi slt, %17, %20 : vector<64x128xi32>
    %c0_i32_13 = arith.constant 0 : i32
    %22 = arith.cmpi slt, %15, %c0_i32_13 : i32
    %23 = vector.broadcast %22 : i1 to vector<64x128xi1>
    %24 = vector.broadcast %23 : vector<64x128xi1> to vector<64x128xi1>
    %25 = arith.xori %21, %24 : vector<64x128xi1>
    %26 = arith.andi %25, %19 : vector<64x128xi1>
    %27 = vector.broadcast %15 : i32 to vector<64x128xi32>
    %28 = arith.addi %17, %27 : vector<64x128xi32>
    %29 = arith.select %26, %28, %17 : vector<64x128xi1>, vector<64x128xi32>
    %c8_i32 = arith.constant 8 : i32
    %30 = vector.broadcast %c8_i32 : i32 to vector<64x128xi32>
    %31 = arith.cmpi slt, %29, %30 : vector<64x128xi32>
    %32 = math.tanh %12 : vector<64x128xf32>
    %cst_14 = arith.constant 0.000000e+00 : f32
    %33 = vector.broadcast %cst_14 : f32 to vector<64x128xf32>
    %34 = arith.maximumf %12, %33 : vector<64x128xf32>
    %35 = math.absf %12 : vector<64x128xf32>
    %cst_15 = arith.constant 0.000000e+00 : f32
    %36 = vector.broadcast %cst_15 : f32 to vector<64x128xf32>
    %37 = arith.subf %36, %35 : vector<64x128xf32>
    %38 = math.exp %37 : vector<64x128xf32>
    %39 = math.log1p %38 : vector<64x128xf32>
    %40 = arith.addf %34, %39 : vector<64x128xf32>
    %cst_16 = arith.constant 9.99999974E-6 : f32
    %41 = vector.broadcast %cst_16 : f32 to vector<64x128xf32>
    %42 = arith.addf %40, %41 : vector<64x128xf32>
    %43 = arith.select %31, %32, %42 : vector<64x128xi1>, vector<64x128xf32>
    %44 = tpu.iota {dimensions = array<i32: 1>} : vector<8x128xi32>
    %cst_17 = arith.constant 0.000000e+00 : f32
    %45 = vector.broadcast %cst_17 : f32 to vector<8x128xf32>
    %46 = vector.extract_strided_slice %43 {offsets = [0, 0], sizes = [8, 128], strides = [1, 1]} : vector<64x128xf32> to vector<8x128xf32>
    %c0_i32_18 = arith.constant 0 : i32
    %47 = vector.broadcast %c0_i32_18 : i32 to vector<8x128xi32>
    %48 = arith.cmpi sge, %44, %47 : vector<8x128xi32>
    %c16_i32_19 = arith.constant 16 : i32
    %49 = vector.broadcast %c16_i32_19 : i32 to vector<8x128xi32>
    %50 = arith.cmpi slt, %44, %49 : vector<8x128xi32>
    %51 = arith.andi %48, %50 : vector<8x128xi1>
    %52 = arith.select %51, %46, %45 : vector<8x128xi1>, vector<8x128xf32>
    %53 = vector.extract_strided_slice %43 {offsets = [8, 0], sizes = [8, 128], strides = [1, 1]} : vector<64x128xf32> to vector<8x128xf32>
    %c16_i32_20 = arith.constant 16 : i32
    %54 = vector.broadcast %c16_i32_20 : i32 to vector<8x128xi32>
    %55 = arith.cmpi sge, %44, %54 : vector<8x128xi32>
    %c32_i32 = arith.constant 32 : i32
    %56 = vector.broadcast %c32_i32 : i32 to vector<8x128xi32>
    %57 = arith.cmpi slt, %44, %56 : vector<8x128xi32>
    %58 = arith.andi %55, %57 : vector<8x128xi1>
    %59 = arith.select %58, %53, %52 : vector<8x128xi1>, vector<8x128xf32>
    %60 = vector.extract_strided_slice %43 {offsets = [16, 0], sizes = [8, 128], strides = [1, 1]} : vector<64x128xf32> to vector<8x128xf32>
    %c32_i32_21 = arith.constant 32 : i32
    %61 = vector.broadcast %c32_i32_21 : i32 to vector<8x128xi32>
    %62 = arith.cmpi sge, %44, %61 : vector<8x128xi32>
    %c48_i32 = arith.constant 48 : i32
    %63 = vector.broadcast %c48_i32 : i32 to vector<8x128xi32>
    %64 = arith.cmpi slt, %44, %63 : vector<8x128xi32>
    %65 = arith.andi %62, %64 : vector<8x128xi1>
    %66 = arith.select %65, %60, %59 : vector<8x128xi1>, vector<8x128xf32>
    %67 = vector.extract_strided_slice %43 {offsets = [24, 0], sizes = [8, 128], strides = [1, 1]} : vector<64x128xf32> to vector<8x128xf32>
    %c48_i32_22 = arith.constant 48 : i32
    %68 = vector.broadcast %c48_i32_22 : i32 to vector<8x128xi32>
    %69 = arith.cmpi sge, %44, %68 : vector<8x128xi32>
    %c64_i32 = arith.constant 64 : i32
    %70 = vector.broadcast %c64_i32 : i32 to vector<8x128xi32>
    %71 = arith.cmpi slt, %44, %70 : vector<8x128xi32>
    %72 = arith.andi %69, %71 : vector<8x128xi1>
    %73 = arith.select %72, %67, %66 : vector<8x128xi1>, vector<8x128xf32>
    %74 = vector.extract_strided_slice %43 {offsets = [32, 0], sizes = [8, 128], strides = [1, 1]} : vector<64x128xf32> to vector<8x128xf32>
    %c64_i32_23 = arith.constant 64 : i32
    %75 = vector.broadcast %c64_i32_23 : i32 to vector<8x128xi32>
    %76 = arith.cmpi sge, %44, %75 : vector<8x128xi32>
    %c80_i32 = arith.constant 80 : i32
    %77 = vector.broadcast %c80_i32 : i32 to vector<8x128xi32>
    %78 = arith.cmpi slt, %44, %77 : vector<8x128xi32>
    %79 = arith.andi %76, %78 : vector<8x128xi1>
    %80 = arith.select %79, %74, %73 : vector<8x128xi1>, vector<8x128xf32>
    %81 = vector.extract_strided_slice %43 {offsets = [40, 0], sizes = [8, 128], strides = [1, 1]} : vector<64x128xf32> to vector<8x128xf32>
    %c80_i32_24 = arith.constant 80 : i32
    %82 = vector.broadcast %c80_i32_24 : i32 to vector<8x128xi32>
    %83 = arith.cmpi sge, %44, %82 : vector<8x128xi32>
    %c96_i32 = arith.constant 96 : i32
    %84 = vector.broadcast %c96_i32 : i32 to vector<8x128xi32>
    %85 = arith.cmpi slt, %44, %84 : vector<8x128xi32>
    %86 = arith.andi %83, %85 : vector<8x128xi1>
    %87 = arith.select %86, %81, %80 : vector<8x128xi1>, vector<8x128xf32>
    %88 = vector.extract_strided_slice %43 {offsets = [48, 0], sizes = [8, 128], strides = [1, 1]} : vector<64x128xf32> to vector<8x128xf32>
    %c96_i32_25 = arith.constant 96 : i32
    %89 = vector.broadcast %c96_i32_25 : i32 to vector<8x128xi32>
    %90 = arith.cmpi sge, %44, %89 : vector<8x128xi32>
    %c112_i32 = arith.constant 112 : i32
    %91 = vector.broadcast %c112_i32 : i32 to vector<8x128xi32>
    %92 = arith.cmpi slt, %44, %91 : vector<8x128xi32>
    %93 = arith.andi %90, %92 : vector<8x128xi1>
    %94 = arith.select %93, %88, %87 : vector<8x128xi1>, vector<8x128xf32>
    %95 = vector.extract_strided_slice %43 {offsets = [56, 0], sizes = [8, 128], strides = [1, 1]} : vector<64x128xf32> to vector<8x128xf32>
    %c112_i32_26 = arith.constant 112 : i32
    %96 = vector.broadcast %c112_i32_26 : i32 to vector<8x128xi32>
    %97 = arith.cmpi sge, %44, %96 : vector<8x128xi32>
    %c128_i32 = arith.constant 128 : i32
    %98 = vector.broadcast %c128_i32 : i32 to vector<8x128xi32>
    %99 = arith.cmpi slt, %44, %98 : vector<8x128xi32>
    %100 = arith.andi %97, %99 : vector<8x128xi1>
    %101 = arith.select %100, %95, %94 : vector<8x128xi1>, vector<8x128xf32>
    %c0_27 = arith.constant 0 : index
    %c0_28 = arith.constant 0 : index
    %102 = vector.load %arg6[%c0_27, %c0_28] : memref<8x128xf32, #tpu.memory_space<vmem>>, vector<8x128xf32>
    tpu.vector_store %arg6[%c0_27, %c0_28], %101 {strides = array<i32>} : memref<8x128xf32, #tpu.memory_space<vmem>>, vector<8x128xf32>,
    return
  }
  func.func @transform_0(%arg0: i32) -> (i32, i32) {
    %c0_i32 = arith.constant 0 : i32
    %c0_i32_0 = arith.constant 0 : i32
    return %arg0, %c0_i32 : i32, i32
  }
  func.func @transform_1(%arg0: i32) -> (i32, i32) {
    %c0_i32 = arith.constant 0 : i32
    %c0_i32_0 = arith.constant 0 : i32
    %c0_i32_1 = arith.constant 0 : i32
    return %c0_i32, %c0_i32_0 : i32, i32
  }
  func.func @transform_2(%arg0: i32) -> (i32, i32) {
    %c0_i32 = arith.constant 0 : i32
    %c0_i32_0 = arith.constant 0 : i32
    %c0_i32_1 = arith.constant 0 : i32
    return %c0_i32, %c0_i32_0 : i32, i32
  }
  func.func @transform_3(%arg0: i32) -> (i32, i32) {
    %c0_i32 = arith.constant 0 : i32
    %c0_i32_0 = arith.constant 0 : i32
    %c0_i32_1 = arith.constant 0 : i32
    return %c0_i32, %c0_i32_0 : i32, i32
  }
  func.func @transform_4(%arg0: i32) -> (i32, i32) {
    %c0_i32 = arith.constant 0 : i32
    %c0_i32_0 = arith.constant 0 : i32
    %c0_i32_1 = arith.constant 0 : i32
    return %c0_i32, %c0_i32_0 : i32, i32
  }
  func.func @transform_5(%arg0: i32) -> (i32, i32) {
    %c0_i32 = arith.constant 0 : i32
    %c0_i32_0 = arith.constant 0 : i32
    return %arg0, %c0_i32 : i32, i32
  }
}

</mosaic_0001>

<llo_original>
// kernel: tpu_custom_call.1
$region0: #{tpu_custom_call.1}
  #allocation0 [shape = 'u32[]', space=smem, size = 0x4, offset = 0x4, fixed_abs, tag = 'smem constant byte address 0x4 - core index']
  #allocation1 [shape = 'u32[144,128]{1,0:T(1,128)}', space=vmem, size = 0x12000, scoped, tag = 'internal scratch']
  %s0 = inlined_call_operand.vmem [shape: f32[64,32], index: 0, kind: input, shape index: {}]
  %s1 = inlined_call_operand.vmem [shape: f32[32,128], index: 1, kind: input, shape index: {}]
  %s2 = inlined_call_operand.vmem [shape: f32[1,128], index: 2, kind: input, shape index: {}]
  %s3 = inlined_call_operand.hbm [shape: f32[128,128], index: 3, kind: input, shape index: {}]
  %s4 = inlined_call_operand.vmem [shape: f32[1,128], index: 4, kind: input, shape index: {}]
  %s5 = inlined_call_operand.hbm [shape: f32[8,128], index: 5, kind: output, shape index: {}]
  %s6 = sld [smem:[#allocation0]]
  $region34: #{tpu_custom_call.1} parent=0
    _
  %s8 = ssub.s32 1, %s6
  %s9 = scalar_select 0, %s8, %s6
  $region1: #{tpu_custom_call.1} parent=0
    #allocation2 [shape = 'u8[65536]{0}', space=vmem, size = 0x10000, scoped, tag = 'input window, operand 3, single buffered']
    #allocation3 [shape = 's32[1]{0}', space=sflag, size = 0x4, scoped, tag = 'scoped memory for tpu_custom_call.1']
    #allocation4 [shape = 's32[1]{0}', space=sflag, size = 0x4, scoped, tag = 'scoped memory for tpu_custom_call.1']
    #allocation5 [shape = 'u8[4096]{0}', space=vmem, size = 0x1000, scoped, tag = 'output window, operand 0, single buffered']
    %10 = vsyncpa [#allocation3], 0
    %11 = vsyncpa [#allocation4], 0
    // Predicated region
    $region2: #{tpu_custom_call.1} parent=1 // pred_check
      _
    $region3: #{tpu_custom_call.1} parent=1 // pred_check_branch
      %13 = sbr.rel (0) target = $region5
    $region4: #{tpu_custom_call.1} parent=1 // pred_region
      _
    $region5: #{tpu_custom_call.1} parent=1 // pred_fallthru
      _
    // Predicated region
    $region6: #{tpu_custom_call.1} parent=1 // pred_check
      _
    $region7: #{tpu_custom_call.1} parent=1 // pred_check_branch
      %15 = sbr.rel (0) target = $region9
    $region8: #{tpu_custom_call.1} parent=1 // pred_region
      _
    $region9: #{tpu_custom_call.1} parent=1 // pred_fallthru
      _
    // Predicated region
    $region10: #{tpu_custom_call.1} parent=1 // pred_check
      _
    $region11: #{tpu_custom_call.1} parent=1 // pred_check_branch
      %17 = sbr.rel (0) target = $region13
    $region12: #{tpu_custom_call.1} parent=1 // pred_region
      _
    $region13: #{tpu_custom_call.1} parent=1 // pred_fallthru
      _
    // Predicated region
    $region14: #{tpu_custom_call.1} parent=1 // pred_check
      _
    $region15: #{tpu_custom_call.1} parent=1 // pred_check_branch
      %19 = sbr.rel (0) target = $region17
    $region16: #{tpu_custom_call.1} parent=1 // pred_region
      %s21 = ssub.s32 2048, 2048
      %22 = vsyncadd [#allocation3], %s21
      %s23 = sshll.u32 [#allocation2], 4
      %s24 = int_to_ptr.vmem [resolvable:$true] %s23
      %29 = dma.hbm_to_vmem [thread:$0]  %s3, 2048, %s24, [#allocation3], 128, 128, 8
    $region17: #{tpu_custom_call.1} parent=1 // pred_fallthru
      _
    // Predicated region
    $region18: #{tpu_custom_call.1} parent=1 // pred_check
      _
    $region19: #{tpu_custom_call.1} parent=1 // pred_check_branch
      %31 = sbr.rel (0) target = $region21
    $region20: #{tpu_custom_call.1} parent=1 // pred_region
      _
    $region21: #{tpu_custom_call.1} parent=1 // pred_fallthru
      _
    // Predicated region
    $region22: #{tpu_custom_call.1} parent=1 // pred_check
      _
    $region23: #{tpu_custom_call.1} parent=1 // pred_check_branch
      %33 = sbr.rel (0) target = $region25
    $region24: #{tpu_custom_call.1} parent=1 // pred_region
      %34 = dma.done [#allocation3], 2048
    $region25: #{tpu_custom_call.1} parent=1 // pred_fallthru
      _
    %v35 = vld [vmem:[%s0] sm:$0xff]
    %v36 = vld [vmem:[%s0 + $0x8] sm:$0xff]
    %v37 = vld [vmem:[%s0 + $0x10] sm:$0xff]
    %v38 = vld [vmem:[%s0 + $0x18] sm:$0xff]
    %v39 = vld [vmem:[%s0 + $0x20] sm:$0xff]
    %v40 = vld [vmem:[%s0 + $0x28] sm:$0xff]
    %v41 = vld [vmem:[%s0 + $0x30] sm:$0xff]
    %v42 = vld [vmem:[%s0 + $0x38] sm:$0xff]
    %v43 = vld [vmem:[%s1] sm:$0xff]
    %v44 = vld [vmem:[%s1 + $0x8] sm:$0xff]
    %v45 = vld [vmem:[%s1 + $0x10] sm:$0xff]
    %v46 = vld [vmem:[%s1 + $0x18] sm:$0xff]
    %v47 = vld [vmem:[%s2] sm:$0x1]
    %v49 = vlaneseq
    %v50 = vshrl.u32 %v49, 7
    %v51 = vsub.s32 0, %v50
    %v52 = vrot.slane %v47, %v51
    %vm54 = vcmask 261120
    %v56 = vsel %vm54, %v35, 0
    %v59 = vsel %vm54, %v36, 0
    %v62 = vsel %vm54, %v37, 0
    %v65 = vsel %vm54, %v38, 0
    %v68 = vsel %vm54, %v39, 0
    %v71 = vsel %vm54, %v40, 0
    %v74 = vsel %vm54, %v41, 0
    %v77 = vsel %vm54, %v42, 0
    %79 = vmatprep.subr.mxu0 0.0
    %80 = vmatpush1.msra.mxu0 0.0
    %81 = vmatprep.subr.mxu0 0.0
    %82 = vmatpush1.msra.mxu0 0.0
    %83 = vmatprep.subr.mxu0 0.0
    %84 = vmatpush1.msra.mxu0 0.0
    %85 = vmatprep.subr.mxu0 0.0
    %86 = vmatpush1.msra.mxu0 0.0
    %87 = vmatprep.subr.mxu0 0.0
    %88 = vmatpush1.msra.mxu0 0.0
    %89 = vmatprep.subr.mxu0 0.0
    %90 = vmatpush1.msra.mxu0 0.0
    %91 = vmatprep.subr.mxu0 0.0
    %92 = vmatpush1.msra.mxu0 0.0
    %93 = vmatprep.subr.mxu0 0.0
    %94 = vmatpush1.msra.mxu0 0.0
    %95 = vmatprep.subr.mxu0 0.0
    %96 = vmatpush1.msra.mxu0 0.0
    %97 = vmatprep.subr.mxu0 0.0
    %98 = vmatpush1.msra.mxu0 0.0
    %99 = vmatprep.subr.mxu0 0.0
    %100 = vmatpush1.msra.mxu0 0.0
    %101 = vmatprep.subr.mxu0 0.0
    %102 = vmatpush1.msra.mxu0 0.0
    %103 = vmatprep.subr.mxu0 0.0
    %v104 = vand.u32 %v46, 4294901760
    %105 = vmatpush1.msra.mxu0 %v104
    %106 = vmatprep.subr.mxu0 0.0
    %v107 = vand.u32 %v45, 4294901760
    %108 = vmatpush1.msra.mxu0 %v107
    %109 = vmatprep.subr.mxu0 0.0
    %v110 = vand.u32 %v44, 4294901760
    %111 = vmatpush1.msra.mxu0 %v110
    %112 = vmatprep.subr.mxu0 0.0
    %v113 = vand.u32 %v43, 4294901760
    %114 = vmatpush1.msra.mxu0 %v113
    %115 = vmatprep.subr.mxu0 0.0
    %116 = vmatpush2.msra.mxu0 0.0
    %117 = vmatprep.subr.mxu0 0.0
    %118 = vmatpush2.msra.mxu0 0.0
    %119 = vmatprep.subr.mxu0 0.0
    %120 = vmatpush2.msra.mxu0 0.0
    %121 = vmatprep.subr.mxu0 0.0
    %122 = vmatpush2.msra.mxu0 0.0
    %123 = vmatprep.subr.mxu0 0.0
    %124 = vmatpush2.msra.mxu0 0.0
    %125 = vmatprep.subr.mxu0 0.0
    %126 = vmatpush2.msra.mxu0 0.0
    %127 = vmatprep.subr.mxu0 0.0
    %128 = vmatpush2.msra.mxu0 0.0
    %129 = vmatprep.subr.mxu0 0.0
    %130 = vmatpush2.msra.mxu0 0.0
    %131 = vmatprep.subr.mxu0 0.0
    %132 = vmatpush2.msra.mxu0 0.0
    %133 = vmatprep.subr.mxu0 0.0
    %134 = vmatpush2.msra.mxu0 0.0
    %135 = vmatprep.subr.mxu0 0.0
    %136 = vmatpush2.msra.mxu0 0.0
    %137 = vmatprep.subr.mxu0 0.0
    %138 = vmatpush2.msra.mxu0 0.0
    %139 = vmatprep.subr.mxu0 0.0
    %140 = vmatpush2.msra.mxu0 0.0
    %141 = vmatprep.subr.mxu0 0.0
    %142 = vmatpush2.msra.mxu0 0.0
    %143 = vmatprep.subr.mxu0 0.0
    %144 = vmatpush2.msra.mxu0 0.0
    %145 = vmatprep.subr.mxu0 0.0
    %146 = vmatpush2.msra.mxu0 0.0
    %147 = vmatprep.mubr.f32.mxu0 0.0
    %v148 = vand.u32 %v56, 4294901760
    %v149 = vsub.f32 %v56, %v148
    %v150 = vand.u32 %v149, 4294901760
    %v151 = vsub.f32 %v149, %v150
    %v152 = vand.u32 %v151, 4294901760
    %153 = vmatmul.mubr.f32.gmra.mxu0 %v152
    %v154 = vpop.f32.mrf.mxu0
    %v155 = vadd.f32 %v52, %v154
    %v156 = vpop.f32.mrf.mxu0
    %157 = vmatprep.mubr.f32.mxu0 0.0
    %v158 = vand.u32 %v59, 4294901760
    %v159 = vsub.f32 %v59, %v158
    %v160 = vand.u32 %v159, 4294901760
    %v161 = vsub.f32 %v159, %v160
    %v162 = vand.u32 %v161, 4294901760
    %163 = vmatmul.mubr.f32.gmra.mxu0 %v162
    %v164 = vpop.f32.mrf.mxu0
    %v165 = vadd.f32 %v52, %v164
    %v166 = vpop.f32.mrf.mxu0
    %167 = vmatprep.mubr.f32.mxu0 0.0
    %v168 = vand.u32 %v62, 4294901760
    %v169 = vsub.f32 %v62, %v168
    %v170 = vand.u32 %v169, 4294901760
    %v171 = vsub.f32 %v169, %v170
    %v172 = vand.u32 %v171, 4294901760
    %173 = vmatmul.mubr.f32.gmra.mxu0 %v172
    %v174 = vpop.f32.mrf.mxu0
    %v175 = vadd.f32 %v52, %v174
    %v176 = vpop.f32.mrf.mxu0
    %177 = vmatprep.mubr.f32.mxu0 0.0
    %v178 = vand.u32 %v65, 4294901760
    %v179 = vsub.f32 %v65, %v178
    %v180 = vand.u32 %v179, 4294901760
    %v181 = vsub.f32 %v179, %v180
    %v182 = vand.u32 %v181, 4294901760
    %183 = vmatmul.mubr.f32.gmra.mxu0 %v182
    %v184 = vpop.f32.mrf.mxu0
    %v185 = vadd.f32 %v52, %v184
    %v186 = vpop.f32.mrf.mxu0
    %187 = vmatprep.mubr.f32.mxu0 0.0
    %v188 = vand.u32 %v68, 4294901760
    %v189 = vsub.f32 %v68, %v188
    %v190 = vand.u32 %v189, 4294901760
    %v191 = vsub.f32 %v189, %v190
    %v192 = vand.u32 %v191, 4294901760
    %193 = vmatmul.mubr.f32.gmra.mxu0 %v192
    %v194 = vpop.f32.mrf.mxu0
    %v195 = vadd.f32 %v52, %v194
    %v196 = vpop.f32.mrf.mxu0
    %197 = vmatprep.mubr.f32.mxu0 0.0
    %v198 = vand.u32 %v71, 4294901760
    %v199 = vsub.f32 %v71, %v198
    %v200 = vand.u32 %v199, 4294901760
    %v201 = vsub.f32 %v199, %v200
    %v202 = vand.u32 %v201, 4294901760
    %203 = vmatmul.mubr.f32.gmra.mxu0 %v202
    %v204 = vpop.f32.mrf.mxu0
    %v205 = vadd.f32 %v52, %v204
    %v206 = vpop.f32.mrf.mxu0
    %207 = vmatprep.mubr.f32.mxu0 0.0
    %v208 = vand.u32 %v74, 4294901760
    %v209 = vsub.f32 %v74, %v208
    %v210 = vand.u32 %v209, 4294901760
    %v211 = vsub.f32 %v209, %v210
    %v212 = vand.u32 %v211, 4294901760
    %213 = vmatmul.mubr.f32.gmra.mxu0 %v212
    %v214 = vpop.f32.mrf.mxu0
    %v215 = vadd.f32 %v52, %v214
    %v216 = vpop.f32.mrf.mxu0
    %217 = vmatprep.mubr.f32.mxu0 0.0
    %v218 = vand.u32 %v77, 4294901760
    %v219 = vsub.f32 %v77, %v218
    %v220 = vand.u32 %v219, 4294901760
    %v221 = vsub.f32 %v219, %v220
    %v222 = vand.u32 %v221, 4294901760
    %223 = vmatmul.mubr.f32.gmra.mxu0 %v222
    %v224 = vpop.f32.mrf.mxu0
    %v225 = vadd.f32 %v52, %v224
    %v226 = vpop.f32.mrf.mxu0
    %227 = vdwg.mxu0
    %228 = vmatprep.subr.mxu0 0.0
    %229 = vmatpush1.msra.mxu0 0.0
    %230 = vmatprep.subr.mxu0 0.0
    %231 = vmatpush1.msra.mxu0 0.0
    %232 = vmatprep.subr.mxu0 0.0
    %233 = vmatpush1.msra.mxu0 0.0
    %234 = vmatprep.subr.mxu0 0.0
    %235 = vmatpush1.msra.mxu0 0.0
    %236 = vmatprep.subr.mxu0 0.0
    %237 = vmatpush1.msra.mxu0 0.0
    %238 = vmatprep.subr.mxu0 0.0
    %239 = vmatpush1.msra.mxu0 0.0
    %240 = vmatprep.subr.mxu0 0.0
    %241 = vmatpush1.msra.mxu0 0.0
    %242 = vmatprep.subr.mxu0 0.0
    %243 = vmatpush1.msra.mxu0 0.0
    %244 = vmatprep.subr.mxu0 0.0
    %245 = vmatpush1.msra.mxu0 0.0
    %246 = vmatprep.subr.mxu0 0.0
    %247 = vmatpush1.msra.mxu0 0.0
    %248 = vmatprep.subr.mxu0 0.0
    %249 = vmatpush1.msra.mxu0 0.0
    %250 = vmatprep.subr.mxu0 0.0
    %251 = vmatpush1.msra.mxu0 0.0
    %252 = vmatprep.subr.mxu0 0.0
    %v253 = vand.u32 %v46, 4294901760
    %v254 = vsub.f32 %v46, %v253
    %v255 = vand.u32 %v254, 4294901760
    %v256 = vsub.f32 %v254, %v255
    %v257 = vand.u32 %v256, 4294901760
    %258 = vmatpush1.msra.mxu0 %v257
    %259 = vmatprep.subr.mxu0 0.0
    %v260 = vand.u32 %v45, 4294901760
    %v261 = vsub.f32 %v45, %v260
    %v262 = vand.u32 %v261, 4294901760
    %v263 = vsub.f32 %v261, %v262
    %v264 = vand.u32 %v263, 4294901760
    %265 = vmatpush1.msra.mxu0 %v264
    %266 = vmatprep.subr.mxu0 0.0
    %v267 = vand.u32 %v44, 4294901760
    %v268 = vsub.f32 %v44, %v267
    %v269 = vand.u32 %v268, 4294901760
    %v270 = vsub.f32 %v268, %v269
    %v271 = vand.u32 %v270, 4294901760
    %272 = vmatpush1.msra.mxu0 %v271
    %273 = vmatprep.subr.mxu0 0.0
    %v274 = vand.u32 %v43, 4294901760
    %v275 = vsub.f32 %v43, %v274
    %v276 = vand.u32 %v275, 4294901760
    %v277 = vsub.f32 %v275, %v276
    %v278 = vand.u32 %v277, 4294901760
    %279 = vmatpush1.msra.mxu0 %v278
    %280 = vmatprep.subr.mxu0 0.0
    %281 = vmatpush2.msra.mxu0 0.0
    %282 = vmatprep.subr.mxu0 0.0
    %283 = vmatpush2.msra.mxu0 0.0
    %284 = vmatprep.subr.mxu0 0.0
    %285 = vmatpush2.msra.mxu0 0.0
    %286 = vmatprep.subr.mxu0 0.0
    %287 = vmatpush2.msra.mxu0 0.0
    %288 = vmatprep.subr.mxu0 0.0
    %289 = vmatpush2.msra.mxu0 0.0
    %290 = vmatprep.subr.mxu0 0.0
    %291 = vmatpush2.msra.mxu0 0.0
    %292 = vmatprep.subr.mxu0 0.0
    %293 = vmatpush2.msra.mxu0 0.0
    %294 = vmatprep.subr.mxu0 0.0
    %295 = vmatpush2.msra.mxu0 0.0
    %296 = vmatprep.subr.mxu0 0.0
    %297 = vmatpush2.msra.mxu0 0.0
    %298 = vmatprep.subr.mxu0 0.0
    %299 = vmatpush2.msra.mxu0 0.0
    %300 = vmatprep.subr.mxu0 0.0
    %301 = vmatpush2.msra.mxu0 0.0
    %302 = vmatprep.subr.mxu0 0.0
    %303 = vmatpush2.msra.mxu0 0.0
    %304 = vmatprep.subr.mxu0 0.0
    %305 = vmatpush2.msra.mxu0 0.0
    %306 = vmatprep.subr.mxu0 0.0
    %307 = vmatpush2.msra.mxu0 0.0
    %308 = vmatprep.subr.mxu0 0.0
    %309 = vmatpush2.msra.mxu0 0.0
    %310 = vmatprep.subr.mxu0 0.0
    %311 = vmatpush2.msra.mxu0 0.0
    %312 = vmatprep.mubr.f32.mxu0 0.0
    %v313 = vand.u32 %v56, 4294901760
    %314 = vmatmul.mubr.f32.gmra.mxu0 %v313
    %v315 = vpop.f32.mrf.mxu0
    %v316 = vadd.f32 %v155, %v315
    %v317 = vpop.f32.mrf.mxu0
    %318 = vmatprep.mubr.f32.mxu0 0.0
    %v319 = vand.u32 %v59, 4294901760
    %320 = vmatmul.mubr.f32.gmra.mxu0 %v319
    %v321 = vpop.f32.mrf.mxu0
    %v322 = vadd.f32 %v165, %v321
    %v323 = vpop.f32.mrf.mxu0
    %324 = vmatprep.mubr.f32.mxu0 0.0
    %v325 = vand.u32 %v62, 4294901760
    %326 = vmatmul.mubr.f32.gmra.mxu0 %v325
    %v327 = vpop.f32.mrf.mxu0
    %v328 = vadd.f32 %v175, %v327
    %v329 = vpop.f32.mrf.mxu0
    %330 = vmatprep.mubr.f32.mxu0 0.0
    %v331 = vand.u32 %v65, 4294901760
    %332 = vmatmul.mubr.f32.gmra.mxu0 %v331
    %v333 = vpop.f32.mrf.mxu0
    %v334 = vadd.f32 %v185, %v333
    %v335 = vpop.f32.mrf.mxu0
    %336 = vmatprep.mubr.f32.mxu0 0.0
    %v337 = vand.u32 %v68, 4294901760
    %338 = vmatmul.mubr.f32.gmra.mxu0 %v337
    %v339 = vpop.f32.mrf.mxu0
    %v340 = vadd.f32 %v195, %v339
    %v341 = vpop.f32.mrf.mxu0
    %342 = vmatprep.mubr.f32.mxu0 0.0
    %v343 = vand.u32 %v71, 4294901760
    %344 = vmatmul.mubr.f32.gmra.mxu0 %v343
    %v345 = vpop.f32.mrf.mxu0
    %v346 = vadd.f32 %v205, %v345
    %v347 = vpop.f32.mrf.mxu0
    %348 = vmatprep.mubr.f32.mxu0 0.0
    %v349 = vand.u32 %v74, 4294901760
    %350 = vmatmul.mubr.f32.gmra.mxu0 %v349
    %v351 = vpop.f32.mrf.mxu0
    %v352 = vadd.f32 %v215, %v351
    %v353 = vpop.f32.mrf.mxu0
    %354 = vmatprep.mubr.f32.mxu0 0.0
    %v355 = vand.u32 %v77, 4294901760
    %356 = vmatmul.mubr.f32.gmra.mxu0 %v355
    %v357 = vpop.f32.mrf.mxu0
    %v358 = vadd.f32 %v225, %v357
    %v359 = vpop.f32.mrf.mxu0
    %360 = vdwg.mxu0
    %361 = vmatprep.subr.mxu0 0.0
    %362 = vmatpush1.msra.mxu0 0.0
    %363 = vmatprep.subr.mxu0 0.0
    %364 = vmatpush1.msra.mxu0 0.0
    %365 = vmatprep.subr.mxu0 0.0
    %366 = vmatpush1.msra.mxu0 0.0
    %367 = vmatprep.subr.mxu0 0.0
    %368 = vmatpush1.msra.mxu0 0.0
    %369 = vmatprep.subr.mxu0 0.0
    %370 = vmatpush1.msra.mxu0 0.0
    %371 = vmatprep.subr.mxu0 0.0
    %372 = vmatpush1.msra.mxu0 0.0
    %373 = vmatprep.subr.mxu0 0.0
    %374 = vmatpush1.msra.mxu0 0.0
    %375 = vmatprep.subr.mxu0 0.0
    %376 = vmatpush1.msra.mxu0 0.0
    %377 = vmatprep.subr.mxu0 0.0
    %378 = vmatpush1.msra.mxu0 0.0
    %379 = vmatprep.subr.mxu0 0.0
    %380 = vmatpush1.msra.mxu0 0.0
    %381 = vmatprep.subr.mxu0 0.0
    %382 = vmatpush1.msra.mxu0 0.0
    %383 = vmatprep.subr.mxu0 0.0
    %384 = vmatpush1.msra.mxu0 0.0
    %385 = vmatprep.subr.mxu0 0.0
    %v386 = vand.u32 %v46, 4294901760
    %v387 = vsub.f32 %v46, %v386
    %388 = vmatpush1.msra.mxu0 %v387
    %389 = vmatprep.subr.mxu0 0.0
    %v390 = vand.u32 %v45, 4294901760
    %v391 = vsub.f32 %v45, %v390
    %392 = vmatpush1.msra.mxu0 %v391
    %393 = vmatprep.subr.mxu0 0.0
    %v394 = vand.u32 %v44, 4294901760
    %v395 = vsub.f32 %v44, %v394
    %396 = vmatpush1.msra.mxu0 %v395
    %397 = vmatprep.subr.mxu0 0.0
    %v398 = vand.u32 %v43, 4294901760
    %v399 = vsub.f32 %v43, %v398
    %400 = vmatpush1.msra.mxu0 %v399
    %401 = vmatprep.subr.mxu0 0.0
    %402 = vmatpush2.msra.mxu0 0.0
    %403 = vmatprep.subr.mxu0 0.0
    %404 = vmatpush2.msra.mxu0 0.0
    %405 = vmatprep.subr.mxu0 0.0
    %406 = vmatpush2.msra.mxu0 0.0
    %407 = vmatprep.subr.mxu0 0.0
    %408 = vmatpush2.msra.mxu0 0.0
    %409 = vmatprep.subr.mxu0 0.0
    %410 = vmatpush2.msra.mxu0 0.0
    %411 = vmatprep.subr.mxu0 0.0
    %412 = vmatpush2.msra.mxu0 0.0
    %413 = vmatprep.subr.mxu0 0.0
    %414 = vmatpush2.msra.mxu0 0.0
    %415 = vmatprep.subr.mxu0 0.0
    %416 = vmatpush2.msra.mxu0 0.0
    %417 = vmatprep.subr.mxu0 0.0
    %418 = vmatpush2.msra.mxu0 0.0
    %419 = vmatprep.subr.mxu0 0.0
    %420 = vmatpush2.msra.mxu0 0.0
    %421 = vmatprep.subr.mxu0 0.0
    %422 = vmatpush2.msra.mxu0 0.0
    %423 = vmatprep.subr.mxu0 0.0
    %424 = vmatpush2.msra.mxu0 0.0
    %425 = vmatprep.subr.mxu0 0.0
    %426 = vmatpush2.msra.mxu0 0.0
    %427 = vmatprep.subr.mxu0 0.0
    %428 = vmatpush2.msra.mxu0 0.0
    %429 = vmatprep.subr.mxu0 0.0
    %430 = vmatpush2.msra.mxu0 0.0
    %431 = vmatprep.subr.mxu0 0.0
    %432 = vmatpush2.msra.mxu0 0.0
    %433 = vmatprep.mubr.f32.mxu0 0.0
    %v434 = vand.u32 %v56, 4294901760
    %v435 = vsub.f32 %v56, %v434
    %436 = vmatmul.mubr.f32.gmra.mxu0 %v435
    %v437 = vpop.f32.mrf.mxu0
    %v438 = vadd.f32 %v316, %v437
    %v439 = vpop.f32.mrf.mxu0
    %440 = vmatprep.mubr.f32.mxu0 0.0
    %v441 = vand.u32 %v59, 4294901760
    %v442 = vsub.f32 %v59, %v441
    %443 = vmatmul.mubr.f32.gmra.mxu0 %v442
    %v444 = vpop.f32.mrf.mxu0
    %v445 = vadd.f32 %v322, %v444
    %v446 = vpop.f32.mrf.mxu0
    %447 = vmatprep.mubr.f32.mxu0 0.0
    %v448 = vand.u32 %v62, 4294901760
    %v449 = vsub.f32 %v62, %v448
    %450 = vmatmul.mubr.f32.gmra.mxu0 %v449
    %v451 = vpop.f32.mrf.mxu0
    %v452 = vadd.f32 %v328, %v451
    %v453 = vpop.f32.mrf.mxu0
    %454 = vmatprep.mubr.f32.mxu0 0.0
    %v455 = vand.u32 %v65, 4294901760
    %v456 = vsub.f32 %v65, %v455
    %457 = vmatmul.mubr.f32.gmra.mxu0 %v456
    %v458 = vpop.f32.mrf.mxu0
    %v459 = vadd.f32 %v334, %v458
    %v460 = vpop.f32.mrf.mxu0
    %461 = vmatprep.mubr.f32.mxu0 0.0
    %v462 = vand.u32 %v68, 4294901760
    %v463 = vsub.f32 %v68, %v462
    %464 = vmatmul.mubr.f32.gmra.mxu0 %v463
    %v465 = vpop.f32.mrf.mxu0
    %v466 = vadd.f32 %v340, %v465
    %v467 = vpop.f32.mrf.mxu0
    %468 = vmatprep.mubr.f32.mxu0 0.0
    %v469 = vand.u32 %v71, 4294901760
    %v470 = vsub.f32 %v71, %v469
    %471 = vmatmul.mubr.f32.gmra.mxu0 %v470
    %v472 = vpop.f32.mrf.mxu0
    %v473 = vadd.f32 %v346, %v472
    %v474 = vpop.f32.mrf.mxu0
    %475 = vmatprep.mubr.f32.mxu0 0.0
    %v476 = vand.u32 %v74, 4294901760
    %v477 = vsub.f32 %v74, %v476
    %478 = vmatmul.mubr.f32.gmra.mxu0 %v477
    %v479 = vpop.f32.mrf.mxu0
    %v480 = vadd.f32 %v352, %v479
    %v481 = vpop.f32.mrf.mxu0
    %482 = vmatprep.mubr.f32.mxu0 0.0
    %v483 = vand.u32 %v77, 4294901760
    %v484 = vsub.f32 %v77, %v483
    %485 = vmatmul.mubr.f32.gmra.mxu0 %v484
    %v486 = vpop.f32.mrf.mxu0
    %v487 = vadd.f32 %v358, %v486
    %v488 = vpop.f32.mrf.mxu0
    %489 = vdwg.mxu0
    %490 = vmatprep.subr.mxu0 0.0
    %491 = vmatpush1.msra.mxu0 0.0
    %492 = vmatprep.subr.mxu0 0.0
    %493 = vmatpush1.msra.mxu0 0.0
    %494 = vmatprep.subr.mxu0 0.0
    %495 = vmatpush1.msra.mxu0 0.0
    %496 = vmatprep.subr.mxu0 0.0
    %497 = vmatpush1.msra.mxu0 0.0
    %498 = vmatprep.subr.mxu0 0.0
    %499 = vmatpush1.msra.mxu0 0.0
    %500 = vmatprep.subr.mxu0 0.0
    %501 = vmatpush1.msra.mxu0 0.0
    %502 = vmatprep.subr.mxu0 0.0
    %503 = vmatpush1.msra.mxu0 0.0
    %504 = vmatprep.subr.mxu0 0.0
    %505 = vmatpush1.msra.mxu0 0.0
    %506 = vmatprep.subr.mxu0 0.0
    %507 = vmatpush1.msra.mxu0 0.0
    %508 = vmatprep.subr.mxu0 0.0
    %509 = vmatpush1.msra.mxu0 0.0
    %510 = vmatprep.subr.mxu0 0.0
    %511 = vmatpush1.msra.mxu0 0.0
    %512 = vmatprep.subr.mxu0 0.0
    %513 = vmatpush1.msra.mxu0 0.0
    %514 = vmatprep.subr.mxu0 0.0
    %v515 = vand.u32 %v46, 4294901760
    %516 = vmatpush1.msra.mxu0 %v515
    %517 = vmatprep.subr.mxu0 0.0
    %v518 = vand.u32 %v45, 4294901760
    %519 = vmatpush1.msra.mxu0 %v518
    %520 = vmatprep.subr.mxu0 0.0
    %v521 = vand.u32 %v44, 4294901760
    %522 = vmatpush1.msra.mxu0 %v521
    %523 = vmatprep.subr.mxu0 0.0
    %v524 = vand.u32 %v43, 4294901760
    %525 = vmatpush1.msra.mxu0 %v524
    %526 = vmatprep.subr.mxu0 0.0
    %527 = vmatpush2.msra.mxu0 0.0
    %528 = vmatprep.subr.mxu0 0.0
    %529 = vmatpush2.msra.mxu0 0.0
    %530 = vmatprep.subr.mxu0 0.0
    %531 = vmatpush2.msra.mxu0 0.0
    %532 = vmatprep.subr.mxu0 0.0
    %533 = vmatpush2.msra.mxu0 0.0
    %534 = vmatprep.subr.mxu0 0.0
    %535 = vmatpush2.msra.mxu0 0.0
    %536 = vmatprep.subr.mxu0 0.0
    %537 = vmatpush2.msra.mxu0 0.0
    %538 = vmatprep.subr.mxu0 0.0
    %539 = vmatpush2.msra.mxu0 0.0
    %540 = vmatprep.subr.mxu0 0.0
    %541 = vmatpush2.msra.mxu0 0.0
    %542 = vmatprep.subr.mxu0 0.0
    %543 = vmatpush2.msra.mxu0 0.0
    %544 = vmatprep.subr.mxu0 0.0
    %545 = vmatpush2.msra.mxu0 0.0
    %546 = vmatprep.subr.mxu0 0.0
    %547 = vmatpush2.msra.mxu0 0.0
    %548 = vmatprep.subr.mxu0 0.0
    %549 = vmatpush2.msra.mxu0 0.0
    %550 = vmatprep.subr.mxu0 0.0
    %551 = vmatpush2.msra.mxu0 0.0
    %552 = vmatprep.subr.mxu0 0.0
    %553 = vmatpush2.msra.mxu0 0.0
    %554 = vmatprep.subr.mxu0 0.0
    %555 = vmatpush2.msra.mxu0 0.0
    %556 = vmatprep.subr.mxu0 0.0
    %557 = vmatpush2.msra.mxu0 0.0
    %558 = vmatprep.mubr.f32.mxu0 0.0
    %v559 = vand.u32 %v56, 4294901760
    %v560 = vsub.f32 %v56, %v559
    %v561 = vand.u32 %v560, 4294901760
    %562 = vmatmul.mubr.f32.gmra.mxu0 %v561
    %v563 = vpop.f32.mrf.mxu0
    %v564 = vadd.f32 %v438, %v563
    %v565 = vpop.f32.mrf.mxu0
    %566 = vmatprep.mubr.f32.mxu0 0.0
    %v567 = vand.u32 %v59, 4294901760
    %v568 = vsub.f32 %v59, %v567
    %v569 = vand.u32 %v568, 4294901760
    %570 = vmatmul.mubr.f32.gmra.mxu0 %v569
    %v571 = vpop.f32.mrf.mxu0
    %v572 = vadd.f32 %v445, %v571
    %v573 = vpop.f32.mrf.mxu0
    %574 = vmatprep.mubr.f32.mxu0 0.0
    %v575 = vand.u32 %v62, 4294901760
    %v576 = vsub.f32 %v62, %v575
    %v577 = vand.u32 %v576, 4294901760
    %578 = vmatmul.mubr.f32.gmra.mxu0 %v577
    %v579 = vpop.f32.mrf.mxu0
    %v580 = vadd.f32 %v452, %v579
    %v581 = vpop.f32.mrf.mxu0
    %582 = vmatprep.mubr.f32.mxu0 0.0
    %v583 = vand.u32 %v65, 4294901760
    %v584 = vsub.f32 %v65, %v583
    %v585 = vand.u32 %v584, 4294901760
    %586 = vmatmul.mubr.f32.gmra.mxu0 %v585
    %v587 = vpop.f32.mrf.mxu0
    %v588 = vadd.f32 %v459, %v587
    %v589 = vpop.f32.mrf.mxu0
    %590 = vmatprep.mubr.f32.mxu0 0.0
    %v591 = vand.u32 %v68, 4294901760
    %v592 = vsub.f32 %v68, %v591
    %v593 = vand.u32 %v592, 4294901760
    %594 = vmatmul.mubr.f32.gmra.mxu0 %v593
    %v595 = vpop.f32.mrf.mxu0
    %v596 = vadd.f32 %v466, %v595
    %v597 = vpop.f32.mrf.mxu0
    %598 = vmatprep.mubr.f32.mxu0 0.0
    %v599 = vand.u32 %v71, 4294901760
    %v600 = vsub.f32 %v71, %v599
    %v601 = vand.u32 %v600, 4294901760
    %602 = vmatmul.mubr.f32.gmra.mxu0 %v601
    %v603 = vpop.f32.mrf.mxu0
    %v604 = vadd.f32 %v473, %v603
    %v605 = vpop.f32.mrf.mxu0
    %606 = vmatprep.mubr.f32.mxu0 0.0
    %v607 = vand.u32 %v74, 4294901760
    %v608 = vsub.f32 %v74, %v607
    %v609 = vand.u32 %v608, 4294901760
    %610 = vmatmul.mubr.f32.gmra.mxu0 %v609
    %v611 = vpop.f32.mrf.mxu0
    %v612 = vadd.f32 %v480, %v611
    %v613 = vpop.f32.mrf.mxu0
    %614 = vmatprep.mubr.f32.mxu0 0.0
    %v615 = vand.u32 %v77, 4294901760
    %v616 = vsub.f32 %v77, %v615
    %v617 = vand.u32 %v616, 4294901760
    %618 = vmatmul.mubr.f32.gmra.mxu0 %v617
    %v619 = vpop.f32.mrf.mxu0
    %v620 = vadd.f32 %v487, %v619
    %v621 = vpop.f32.mrf.mxu0
    %622 = vdwg.mxu0
    %623 = vmatprep.subr.mxu0 0.0
    %624 = vmatpush1.msra.mxu0 0.0
    %625 = vmatprep.subr.mxu0 0.0
    %626 = vmatpush1.msra.mxu0 0.0
    %627 = vmatprep.subr.mxu0 0.0
    %628 = vmatpush1.msra.mxu0 0.0
    %629 = vmatprep.subr.mxu0 0.0
    %630 = vmatpush1.msra.mxu0 0.0
    %631 = vmatprep.subr.mxu0 0.0
    %632 = vmatpush1.msra.mxu0 0.0
    %633 = vmatprep.subr.mxu0 0.0
    %634 = vmatpush1.msra.mxu0 0.0
    %635 = vmatprep.subr.mxu0 0.0
    %636 = vmatpush1.msra.mxu0 0.0
    %637 = vmatprep.subr.mxu0 0.0
    %638 = vmatpush1.msra.mxu0 0.0
    %639 = vmatprep.subr.mxu0 0.0
    %640 = vmatpush1.msra.mxu0 0.0
    %641 = vmatprep.subr.mxu0 0.0
    %642 = vmatpush1.msra.mxu0 0.0
    %643 = vmatprep.subr.mxu0 0.0
    %644 = vmatpush1.msra.mxu0 0.0
    %645 = vmatprep.subr.mxu0 0.0
    %646 = vmatpush1.msra.mxu0 0.0
    %647 = vmatprep.subr.mxu0 0.0
    %v648 = vand.u32 %v46, 4294901760
    %v649 = vsub.f32 %v46, %v648
    %v650 = vand.u32 %v649, 4294901760
    %651 = vmatpush1.msra.mxu0 %v650
    %652 = vmatprep.subr.mxu0 0.0
    %v653 = vand.u32 %v45, 4294901760
    %v654 = vsub.f32 %v45, %v653
    %v655 = vand.u32 %v654, 4294901760
    %656 = vmatpush1.msra.mxu0 %v655
    %657 = vmatprep.subr.mxu0 0.0
    %v658 = vand.u32 %v44, 4294901760
    %v659 = vsub.f32 %v44, %v658
    %v660 = vand.u32 %v659, 4294901760
    %661 = vmatpush1.msra.mxu0 %v660
    %662 = vmatprep.subr.mxu0 0.0
    %v663 = vand.u32 %v43, 4294901760
    %v664 = vsub.f32 %v43, %v663
    %v665 = vand.u32 %v664, 4294901760
    %666 = vmatpush1.msra.mxu0 %v665
    %667 = vmatprep.subr.mxu0 0.0
    %668 = vmatpush2.msra.mxu0 0.0
    %669 = vmatprep.subr.mxu0 0.0
    %670 = vmatpush2.msra.mxu0 0.0
    %671 = vmatprep.subr.mxu0 0.0
    %672 = vmatpush2.msra.mxu0 0.0
    %673 = vmatprep.subr.mxu0 0.0
    %674 = vmatpush2.msra.mxu0 0.0
    %675 = vmatprep.subr.mxu0 0.0
    %676 = vmatpush2.msra.mxu0 0.0
    %677 = vmatprep.subr.mxu0 0.0
    %678 = vmatpush2.msra.mxu0 0.0
    %679 = vmatprep.subr.mxu0 0.0
    %680 = vmatpush2.msra.mxu0 0.0
    %681 = vmatprep.subr.mxu0 0.0
    %682 = vmatpush2.msra.mxu0 0.0
    %683 = vmatprep.subr.mxu0 0.0
    %684 = vmatpush2.msra.mxu0 0.0
    %685 = vmatprep.subr.mxu0 0.0
    %686 = vmatpush2.msra.mxu0 0.0
    %687 = vmatprep.subr.mxu0 0.0
    %688 = vmatpush2.msra.mxu0 0.0
    %689 = vmatprep.subr.mxu0 0.0
    %690 = vmatpush2.msra.mxu0 0.0
    %691 = vmatprep.subr.mxu0 0.0
    %692 = vmatpush2.msra.mxu0 0.0
    %693 = vmatprep.subr.mxu0 0.0
    %694 = vmatpush2.msra.mxu0 0.0
    %695 = vmatprep.subr.mxu0 0.0
    %696 = vmatpush2.msra.mxu0 0.0
    %697 = vmatprep.subr.mxu0 0.0
    %698 = vmatpush2.msra.mxu0 0.0
    %699 = vmatprep.mubr.f32.mxu0 0.0
    %v700 = vand.u32 %v56, 4294901760
    %701 = vmatmul.mubr.f32.gmra.mxu0 %v700
    %v702 = vpop.f32.mrf.mxu0
    %v703 = vadd.f32 %v564, %v702
    %v704 = vpop.f32.mrf.mxu0
    %705 = vmatprep.mubr.f32.mxu0 0.0
    %v706 = vand.u32 %v59, 4294901760
    %707 = vmatmul.mubr.f32.gmra.mxu0 %v706
    %v708 = vpop.f32.mrf.mxu0
    %v709 = vadd.f32 %v572, %v708
    %v710 = vpop.f32.mrf.mxu0
    %711 = vmatprep.mubr.f32.mxu0 0.0
    %v712 = vand.u32 %v62, 4294901760
    %713 = vmatmul.mubr.f32.gmra.mxu0 %v712
    %v714 = vpop.f32.mrf.mxu0
    %v715 = vadd.f32 %v580, %v714
    %v716 = vpop.f32.mrf.mxu0
    %717 = vmatprep.mubr.f32.mxu0 0.0
    %v718 = vand.u32 %v65, 4294901760
    %719 = vmatmul.mubr.f32.gmra.mxu0 %v718
    %v720 = vpop.f32.mrf.mxu0
    %v721 = vadd.f32 %v588, %v720
    %v722 = vpop.f32.mrf.mxu0
    %723 = vmatprep.mubr.f32.mxu0 0.0
    %v724 = vand.u32 %v68, 4294901760
    %725 = vmatmul.mubr.f32.gmra.mxu0 %v724
    %v726 = vpop.f32.mrf.mxu0
    %v727 = vadd.f32 %v596, %v726
    %v728 = vpop.f32.mrf.mxu0
    %729 = vmatprep.mubr.f32.mxu0 0.0
    %v730 = vand.u32 %v71, 4294901760
    %731 = vmatmul.mubr.f32.gmra.mxu0 %v730
    %v732 = vpop.f32.mrf.mxu0
    %v733 = vadd.f32 %v604, %v732
    %v734 = vpop.f32.mrf.mxu0
    %735 = vmatprep.mubr.f32.mxu0 0.0
    %v736 = vand.u32 %v74, 4294901760
    %737 = vmatmul.mubr.f32.gmra.mxu0 %v736
    %v738 = vpop.f32.mrf.mxu0
    %v739 = vadd.f32 %v612, %v738
    %v740 = vpop.f32.mrf.mxu0
    %741 = vmatprep.mubr.f32.mxu0 0.0
    %v742 = vand.u32 %v77, 4294901760
    %743 = vmatmul.mubr.f32.gmra.mxu0 %v742
    %v744 = vpop.f32.mrf.mxu0
    %v745 = vadd.f32 %v620, %v744
    %v746 = vpop.f32.mrf.mxu0
    %747 = vdwg.mxu0
    %748 = vmatprep.subr.mxu0 0.0
    %749 = vmatpush1.msra.mxu0 0.0
    %750 = vmatprep.subr.mxu0 0.0
    %751 = vmatpush1.msra.mxu0 0.0
    %752 = vmatprep.subr.mxu0 0.0
    %753 = vmatpush1.msra.mxu0 0.0
    %754 = vmatprep.subr.mxu0 0.0
    %755 = vmatpush1.msra.mxu0 0.0
    %756 = vmatprep.subr.mxu0 0.0
    %757 = vmatpush1.msra.mxu0 0.0
    %758 = vmatprep.subr.mxu0 0.0
    %759 = vmatpush1.msra.mxu0 0.0
    %760 = vmatprep.subr.mxu0 0.0
    %761 = vmatpush1.msra.mxu0 0.0
    %762 = vmatprep.subr.mxu0 0.0
    %763 = vmatpush1.msra.mxu0 0.0
    %764 = vmatprep.subr.mxu0 0.0
    %765 = vmatpush1.msra.mxu0 0.0
    %766 = vmatprep.subr.mxu0 0.0
    %767 = vmatpush1.msra.mxu0 0.0
    %768 = vmatprep.subr.mxu0 0.0
    %769 = vmatpush1.msra.mxu0 0.0
    %770 = vmatprep.subr.mxu0 0.0
    %771 = vmatpush1.msra.mxu0 0.0
    %772 = vmatprep.subr.mxu0 0.0
    %v773 = vand.u32 %v46, 4294901760
    %774 = vmatpush1.msra.mxu0 %v773
    %775 = vmatprep.subr.mxu0 0.0
    %v776 = vand.u32 %v45, 4294901760
    %777 = vmatpush1.msra.mxu0 %v776
    %778 = vmatprep.subr.mxu0 0.0
    %v779 = vand.u32 %v44, 4294901760
    %780 = vmatpush1.msra.mxu0 %v779
    %781 = vmatprep.subr.mxu0 0.0
    %v782 = vand.u32 %v43, 4294901760
    %783 = vmatpush1.msra.mxu0 %v782
    %784 = vmatprep.subr.mxu0 0.0
    %785 = vmatpush2.msra.mxu0 0.0
    %786 = vmatprep.subr.mxu0 0.0
    %787 = vmatpush2.msra.mxu0 0.0
    %788 = vmatprep.subr.mxu0 0.0
    %789 = vmatpush2.msra.mxu0 0.0
    %790 = vmatprep.subr.mxu0 0.0
    %791 = vmatpush2.msra.mxu0 0.0
    %792 = vmatprep.subr.mxu0 0.0
    %793 = vmatpush2.msra.mxu0 0.0
    %794 = vmatprep.subr.mxu0 0.0
    %795 = vmatpush2.msra.mxu0 0.0
    %796 = vmatprep.subr.mxu0 0.0
    %797 = vmatpush2.msra.mxu0 0.0
    %798 = vmatprep.subr.mxu0 0.0
    %799 = vmatpush2.msra.mxu0 0.0
    %800 = vmatprep.subr.mxu0 0.0
    %801 = vmatpush2.msra.mxu0 0.0
    %802 = vmatprep.subr.mxu0 0.0
    %803 = vmatpush2.msra.mxu0 0.0
    %804 = vmatprep.subr.mxu0 0.0
    %805 = vmatpush2.msra.mxu0 0.0
    %806 = vmatprep.subr.mxu0 0.0
    %807 = vmatpush2.msra.mxu0 0.0
    %808 = vmatprep.subr.mxu0 0.0
    %809 = vmatpush2.msra.mxu0 0.0
    %810 = vmatprep.subr.mxu0 0.0
    %811 = vmatpush2.msra.mxu0 0.0
    %812 = vmatprep.subr.mxu0 0.0
    %813 = vmatpush2.msra.mxu0 0.0
    %814 = vmatprep.subr.mxu0 0.0
    %815 = vmatpush2.msra.mxu0 0.0
    %816 = vmatprep.mubr.f32.mxu0 0.0
    %v817 = vand.u32 %v56, 4294901760
    %818 = vmatmul.mubr.f32.gmra.mxu0 %v817
    %v819 = vpop.f32.mrf.mxu0
    %v820 = vadd.f32 %v703, %v819
    %v821 = vpop.f32.mrf.mxu0
    %822 = vmatprep.mubr.f32.mxu0 0.0
    %v823 = vand.u32 %v59, 4294901760
    %824 = vmatmul.mubr.f32.gmra.mxu0 %v823
    %v825 = vpop.f32.mrf.mxu0
    %v826 = vadd.f32 %v709, %v825
    %v827 = vpop.f32.mrf.mxu0
    %828 = vmatprep.mubr.f32.mxu0 0.0
    %v829 = vand.u32 %v62, 4294901760
    %830 = vmatmul.mubr.f32.gmra.mxu0 %v829
    %v831 = vpop.f32.mrf.mxu0
    %v832 = vadd.f32 %v715, %v831
    %v833 = vpop.f32.mrf.mxu0
    %834 = vmatprep.mubr.f32.mxu0 0.0
    %v835 = vand.u32 %v65, 4294901760
    %836 = vmatmul.mubr.f32.gmra.mxu0 %v835
    %v837 = vpop.f32.mrf.mxu0
    %v838 = vadd.f32 %v721, %v837
    %v839 = vpop.f32.mrf.mxu0
    %840 = vmatprep.mubr.f32.mxu0 0.0
    %v841 = vand.u32 %v68, 4294901760
    %842 = vmatmul.mubr.f32.gmra.mxu0 %v841
    %v843 = vpop.f32.mrf.mxu0
    %v844 = vadd.f32 %v727, %v843
    %v845 = vpop.f32.mrf.mxu0
    %846 = vmatprep.mubr.f32.mxu0 0.0
    %v847 = vand.u32 %v71, 4294901760
    %848 = vmatmul.mubr.f32.gmra.mxu0 %v847
    %v849 = vpop.f32.mrf.mxu0
    %v850 = vadd.f32 %v733, %v849
    %v851 = vpop.f32.mrf.mxu0
    %852 = vmatprep.mubr.f32.mxu0 0.0
    %v853 = vand.u32 %v74, 4294901760
    %854 = vmatmul.mubr.f32.gmra.mxu0 %v853
    %v855 = vpop.f32.mrf.mxu0
    %v856 = vadd.f32 %v739, %v855
    %v857 = vpop.f32.mrf.mxu0
    %858 = vmatprep.mubr.f32.mxu0 0.0
    %v859 = vand.u32 %v77, 4294901760
    %860 = vmatmul.mubr.f32.gmra.mxu0 %v859
    %v861 = vpop.f32.mrf.mxu0
    %v862 = vadd.f32 %v745, %v861
    %v863 = vpop.f32.mrf.mxu0
    %864 = vdwg.mxu0
    %v865 = vmax.f32 %v820, 0.0
    %v866 = vmax.f32 %v826, 0.0
    %v867 = vmax.f32 %v832, 0.0
    %v868 = vmax.f32 %v838, 0.0
    %v869 = vmax.f32 %v844, 0.0
    %v870 = vmax.f32 %v850, 0.0
    %v871 = vmax.f32 %v856, 0.0
    %v872 = vmax.f32 %v862, 0.0
    %v873 = vld [vmem:[#allocation2] sm:$0xff]
    %v874 = vld [vmem:[#allocation2 + $0x8] sm:$0xff]
    %v875 = vld [vmem:[#allocation2 + $0x10] sm:$0xff]
    %v876 = vld [vmem:[#allocation2 + $0x18] sm:$0xff]
    %v877 = vld [vmem:[#allocation2 + $0x20] sm:$0xff]
    %v878 = vld [vmem:[#allocation2 + $0x28] sm:$0xff]
    %v879 = vld [vmem:[#allocation2 + $0x30] sm:$0xff]
    %v880 = vld [vmem:[#allocation2 + $0x38] sm:$0xff]
    %v881 = vld [vmem:[#allocation2 + $0x40] sm:$0xff]
    %v882 = vld [vmem:[#allocation2 + $0x48] sm:$0xff]
    %v883 = vld [vmem:[#allocation2 + $0x50] sm:$0xff]
    %v884 = vld [vmem:[#allocation2 + $0x58] sm:$0xff]
    %v885 = vld [vmem:[#allocation2 + $0x60] sm:$0xff]
    %v886 = vld [vmem:[#allocation2 + $0x68] sm:$0xff]
    %v887 = vld [vmem:[#allocation2 + $0x70] sm:$0xff]
    %v888 = vld [vmem:[#allocation2 + $0x78] sm:$0xff]
    %v889 = vld [vmem:[%s4] sm:$0x1]
    %v891 = vlaneseq
    %v892 = vshrl.u32 %v891, 7
    %v893 = vsub.s32 0, %v892
    %v894 = vrot.slane %v889, %v893
    %896 = vmatprep.subr.mxu0 0.0
    %v897 = vand.u32 %v888, 4294901760
    %898 = vmatpush1.msra.mxu0 %v897
    %899 = vmatprep.subr.mxu0 0.0
    %v900 = vand.u32 %v887, 4294901760
    %901 = vmatpush1.msra.mxu0 %v900
    %902 = vmatprep.subr.mxu0 0.0
    %v903 = vand.u32 %v886, 4294901760
    %904 = vmatpush1.msra.mxu0 %v903
    %905 = vmatprep.subr.mxu0 0.0
    %v906 = vand.u32 %v885, 4294901760
    %907 = vmatpush1.msra.mxu0 %v906
    %908 = vmatprep.subr.mxu0 0.0
    %v909 = vand.u32 %v884, 4294901760
    %910 = vmatpush1.msra.mxu0 %v909
    %911 = vmatprep.subr.mxu0 0.0
    %v912 = vand.u32 %v883, 4294901760
    %913 = vmatpush1.msra.mxu0 %v912
    %914 = vmatprep.subr.mxu0 0.0
    %v915 = vand.u32 %v882, 4294901760
    %916 = vmatpush1.msra.mxu0 %v915
    %917 = vmatprep.subr.mxu0 0.0
    %v918 = vand.u32 %v881, 4294901760
    %919 = vmatpush1.msra.mxu0 %v918
    %920 = vmatprep.subr.mxu0 0.0
    %v921 = vand.u32 %v880, 4294901760
    %922 = vmatpush1.msra.mxu0 %v921
    %923 = vmatprep.subr.mxu0 0.0
    %v924 = vand.u32 %v879, 4294901760
    %925 = vmatpush1.msra.mxu0 %v924
    %926 = vmatprep.subr.mxu0 0.0
    %v927 = vand.u32 %v878, 4294901760
    %928 = vmatpush1.msra.mxu0 %v927
    %929 = vmatprep.subr.mxu0 0.0
    %v930 = vand.u32 %v877, 4294901760
    %931 = vmatpush1.msra.mxu0 %v930
    %932 = vmatprep.subr.mxu0 0.0
    %v933 = vand.u32 %v876, 4294901760
    %934 = vmatpush1.msra.mxu0 %v933
    %935 = vmatprep.subr.mxu0 0.0
    %v936 = vand.u32 %v875, 4294901760
    %937 = vmatpush1.msra.mxu0 %v936
    %938 = vmatprep.subr.mxu0 0.0
    %v939 = vand.u32 %v874, 4294901760
    %940 = vmatpush1.msra.mxu0 %v939
    %941 = vmatprep.subr.mxu0 0.0
    %v942 = vand.u32 %v873, 4294901760
    %943 = vmatpush1.msra.mxu0 %v942
    %944 = vmatprep.subr.mxu0 0.0
    %945 = vmatpush2.msra.mxu0 0.0
    %946 = vmatprep.subr.mxu0 0.0
    %947 = vmatpush2.msra.mxu0 0.0
    %948 = vmatprep.subr.mxu0 0.0
    %949 = vmatpush2.msra.mxu0 0.0
    %950 = vmatprep.subr.mxu0 0.0
    %951 = vmatpush2.msra.mxu0 0.0
    %952 = vmatprep.subr.mxu0 0.0
    %953 = vmatpush2.msra.mxu0 0.0
    %954 = vmatprep.subr.mxu0 0.0
    %955 = vmatpush2.msra.mxu0 0.0
    %956 = vmatprep.subr.mxu0 0.0
    %957 = vmatpush2.msra.mxu0 0.0
    %958 = vmatprep.subr.mxu0 0.0
    %959 = vmatpush2.msra.mxu0 0.0
    %960 = vmatprep.subr.mxu0 0.0
    %961 = vmatpush2.msra.mxu0 0.0
    %962 = vmatprep.subr.mxu0 0.0
    %963 = vmatpush2.msra.mxu0 0.0
    %964 = vmatprep.subr.mxu0 0.0
    %965 = vmatpush2.msra.mxu0 0.0
    %966 = vmatprep.subr.mxu0 0.0
    %967 = vmatpush2.msra.mxu0 0.0
    %968 = vmatprep.subr.mxu0 0.0
    %969 = vmatpush2.msra.mxu0 0.0
    %970 = vmatprep.subr.mxu0 0.0
    %971 = vmatpush2.msra.mxu0 0.0
    %972 = vmatprep.subr.mxu0 0.0
    %973 = vmatpush2.msra.mxu0 0.0
    %974 = vmatprep.subr.mxu0 0.0
    %975 = vmatpush2.msra.mxu0 0.0
    %976 = vmatprep.mubr.f32.mxu0 0.0
    %v977 = vand.u32 %v865, 4294901760
    %v978 = vsub.f32 %v865, %v977
    %v979 = vand.u32 %v978, 4294901760
    %v980 = vsub.f32 %v978, %v979
    %v981 = vand.u32 %v980, 4294901760
    %982 = vmatmul.mubr.f32.gmra.mxu0 %v981
    %v983 = vpop.f32.mrf.mxu0
    %v984 = vadd.f32 %v894, %v983
    %v985 = vpop.f32.mrf.mxu0
    %986 = vmatprep.mubr.f32.mxu0 0.0
    %v987 = vand.u32 %v866, 4294901760
    %v988 = vsub.f32 %v866, %v987
    %v989 = vand.u32 %v988, 4294901760
    %v990 = vsub.f32 %v988, %v989
    %v991 = vand.u32 %v990, 4294901760
    %992 = vmatmul.mubr.f32.gmra.mxu0 %v991
    %v993 = vpop.f32.mrf.mxu0
    %v994 = vadd.f32 %v894, %v993
    %v995 = vpop.f32.mrf.mxu0
    %996 = vmatprep.mubr.f32.mxu0 0.0
    %v997 = vand.u32 %v867, 4294901760
    %v998 = vsub.f32 %v867, %v997
    %v999 = vand.u32 %v998, 4294901760
    %v1000 = vsub.f32 %v998, %v999
    %v1001 = vand.u32 %v1000, 4294901760
    %1002 = vmatmul.mubr.f32.gmra.mxu0 %v1001
    %v1003 = vpop.f32.mrf.mxu0
    %v1004 = vadd.f32 %v894, %v1003
    %v1005 = vpop.f32.mrf.mxu0
    %1006 = vmatprep.mubr.f32.mxu0 0.0
    %v1007 = vand.u32 %v868, 4294901760
    %v1008 = vsub.f32 %v868, %v1007
    %v1009 = vand.u32 %v1008, 4294901760
    %v1010 = vsub.f32 %v1008, %v1009
    %v1011 = vand.u32 %v1010, 4294901760
    %1012 = vmatmul.mubr.f32.gmra.mxu0 %v1011
    %v1013 = vpop.f32.mrf.mxu0
    %v1014 = vadd.f32 %v894, %v1013
    %v1015 = vpop.f32.mrf.mxu0
    %1016 = vmatprep.mubr.f32.mxu0 0.0
    %v1017 = vand.u32 %v869, 4294901760
    %v1018 = vsub.f32 %v869, %v1017
    %v1019 = vand.u32 %v1018, 4294901760
    %v1020 = vsub.f32 %v1018, %v1019
    %v1021 = vand.u32 %v1020, 4294901760
    %1022 = vmatmul.mubr.f32.gmra.mxu0 %v1021
    %v1023 = vpop.f32.mrf.mxu0
    %v1024 = vadd.f32 %v894, %v1023
    %v1025 = vpop.f32.mrf.mxu0
    %1026 = vmatprep.mubr.f32.mxu0 0.0
    %v1027 = vand.u32 %v870, 4294901760
    %v1028 = vsub.f32 %v870, %v1027
    %v1029 = vand.u32 %v1028, 4294901760
    %v1030 = vsub.f32 %v1028, %v1029
    %v1031 = vand.u32 %v1030, 4294901760
    %1032 = vmatmul.mubr.f32.gmra.mxu0 %v1031
    %v1033 = vpop.f32.mrf.mxu0
    %v1034 = vadd.f32 %v894, %v1033
    %v1035 = vpop.f32.mrf.mxu0
    %1036 = vmatprep.mubr.f32.mxu0 0.0
    %v1037 = vand.u32 %v871, 4294901760
    %v1038 = vsub.f32 %v871, %v1037
    %v1039 = vand.u32 %v1038, 4294901760
    %v1040 = vsub.f32 %v1038, %v1039
    %v1041 = vand.u32 %v1040, 4294901760
    %1042 = vmatmul.mubr.f32.gmra.mxu0 %v1041
    %v1043 = vpop.f32.mrf.mxu0
    %v1044 = vadd.f32 %v894, %v1043
    %v1045 = vpop.f32.mrf.mxu0
    %1046 = vmatprep.mubr.f32.mxu0 0.0
    %v1047 = vand.u32 %v872, 4294901760
    %v1048 = vsub.f32 %v872, %v1047
    %v1049 = vand.u32 %v1048, 4294901760
    %v1050 = vsub.f32 %v1048, %v1049
    %v1051 = vand.u32 %v1050, 4294901760
    %1052 = vmatmul.mubr.f32.gmra.mxu0 %v1051
    %v1053 = vpop.f32.mrf.mxu0
    %v1054 = vadd.f32 %v894, %v1053
    %v1055 = vpop.f32.mrf.mxu0
    %1056 = vdwg.mxu0
    %1057 = vmatprep.subr.mxu0 0.0
    %v1058 = vand.u32 %v888, 4294901760
    %v1059 = vsub.f32 %v888, %v1058
    %v1060 = vand.u32 %v1059, 4294901760
    %v1061 = vsub.f32 %v1059, %v1060
    %v1062 = vand.u32 %v1061, 4294901760
    %1063 = vmatpush1.msra.mxu0 %v1062
    %1064 = vmatprep.subr.mxu0 0.0
    %v1065 = vand.u32 %v887, 4294901760
    %v1066 = vsub.f32 %v887, %v1065
    %v1067 = vand.u32 %v1066, 4294901760
    %v1068 = vsub.f32 %v1066, %v1067
    %v1069 = vand.u32 %v1068, 4294901760
    %1070 = vmatpush1.msra.mxu0 %v1069
    %1071 = vmatprep.subr.mxu0 0.0
    %v1072 = vand.u32 %v886, 4294901760
    %v1073 = vsub.f32 %v886, %v1072
    %v1074 = vand.u32 %v1073, 4294901760
    %v1075 = vsub.f32 %v1073, %v1074
    %v1076 = vand.u32 %v1075, 4294901760
    %1077 = vmatpush1.msra.mxu0 %v1076
    %1078 = vmatprep.subr.mxu0 0.0
    %v1079 = vand.u32 %v885, 4294901760
    %v1080 = vsub.f32 %v885, %v1079
    %v1081 = vand.u32 %v1080, 4294901760
    %v1082 = vsub.f32 %v1080, %v1081
    %v1083 = vand.u32 %v1082, 4294901760
    %1084 = vmatpush1.msra.mxu0 %v1083
    %1085 = vmatprep.subr.mxu0 0.0
    %v1086 = vand.u32 %v884, 4294901760
    %v1087 = vsub.f32 %v884, %v1086
    %v1088 = vand.u32 %v1087, 4294901760
    %v1089 = vsub.f32 %v1087, %v1088
    %v1090 = vand.u32 %v1089, 4294901760
    %1091 = vmatpush1.msra.mxu0 %v1090
    %1092 = vmatprep.subr.mxu0 0.0
    %v1093 = vand.u32 %v883, 4294901760
    %v1094 = vsub.f32 %v883, %v1093
    %v1095 = vand.u32 %v1094, 4294901760
    %v1096 = vsub.f32 %v1094, %v1095
    %v1097 = vand.u32 %v1096, 4294901760
    %1098 = vmatpush1.msra.mxu0 %v1097
    %1099 = vmatprep.subr.mxu0 0.0
    %v1100 = vand.u32 %v882, 4294901760
    %v1101 = vsub.f32 %v882, %v1100
    %v1102 = vand.u32 %v1101, 4294901760
    %v1103 = vsub.f32 %v1101, %v1102
    %v1104 = vand.u32 %v1103, 4294901760
    %1105 = vmatpush1.msra.mxu0 %v1104
    %1106 = vmatprep.subr.mxu0 0.0
    %v1107 = vand.u32 %v881, 4294901760
    %v1108 = vsub.f32 %v881, %v1107
    %v1109 = vand.u32 %v1108, 4294901760
    %v1110 = vsub.f32 %v1108, %v1109
    %v1111 = vand.u32 %v1110, 4294901760
    %1112 = vmatpush1.msra.mxu0 %v1111
    %1113 = vmatprep.subr.mxu0 0.0
    %v1114 = vand.u32 %v880, 4294901760
    %v1115 = vsub.f32 %v880, %v1114
    %v1116 = vand.u32 %v1115, 4294901760
    %v1117 = vsub.f32 %v1115, %v1116
    %v1118 = vand.u32 %v1117, 4294901760
    %1119 = vmatpush1.msra.mxu0 %v1118
    %1120 = vmatprep.subr.mxu0 0.0
    %v1121 = vand.u32 %v879, 4294901760
    %v1122 = vsub.f32 %v879, %v1121
    %v1123 = vand.u32 %v1122, 4294901760
    %v1124 = vsub.f32 %v1122, %v1123
    %v1125 = vand.u32 %v1124, 4294901760
    %1126 = vmatpush1.msra.mxu0 %v1125
    %1127 = vmatprep.subr.mxu0 0.0
    %v1128 = vand.u32 %v878, 4294901760
    %v1129 = vsub.f32 %v878, %v1128
    %v1130 = vand.u32 %v1129, 4294901760
    %v1131 = vsub.f32 %v1129, %v1130
    %v1132 = vand.u32 %v1131, 4294901760
    %1133 = vmatpush1.msra.mxu0 %v1132
    %1134 = vmatprep.subr.mxu0 0.0
    %v1135 = vand.u32 %v877, 4294901760
    %v1136 = vsub.f32 %v877, %v1135
    %v1137 = vand.u32 %v1136, 4294901760
    %v1138 = vsub.f32 %v1136, %v1137
    %v1139 = vand.u32 %v1138, 4294901760
    %1140 = vmatpush1.msra.mxu0 %v1139
    %1141 = vmatprep.subr.mxu0 0.0
    %v1142 = vand.u32 %v876, 4294901760
    %v1143 = vsub.f32 %v876, %v1142
    %v1144 = vand.u32 %v1143, 4294901760
    %v1145 = vsub.f32 %v1143, %v1144
    %v1146 = vand.u32 %v1145, 4294901760
    %1147 = vmatpush1.msra.mxu0 %v1146
    %1148 = vmatprep.subr.mxu0 0.0
    %v1149 = vand.u32 %v875, 4294901760
    %v1150 = vsub.f32 %v875, %v1149
    %v1151 = vand.u32 %v1150, 4294901760
    %v1152 = vsub.f32 %v1150, %v1151
    %v1153 = vand.u32 %v1152, 4294901760
    %1154 = vmatpush1.msra.mxu0 %v1153
    %1155 = vmatprep.subr.mxu0 0.0
    %v1156 = vand.u32 %v874, 4294901760
    %v1157 = vsub.f32 %v874, %v1156
    %v1158 = vand.u32 %v1157, 4294901760
    %v1159 = vsub.f32 %v1157, %v1158
    %v1160 = vand.u32 %v1159, 4294901760
    %1161 = vmatpush1.msra.mxu0 %v1160
    %1162 = vmatprep.subr.mxu0 0.0
    %v1163 = vand.u32 %v873, 4294901760
    %v1164 = vsub.f32 %v873, %v1163
    %v1165 = vand.u32 %v1164, 4294901760
    %v1166 = vsub.f32 %v1164, %v1165
    %v1167 = vand.u32 %v1166, 4294901760
    %1168 = vmatpush1.msra.mxu0 %v1167
    %1169 = vmatprep.subr.mxu0 0.0
    %1170 = vmatpush2.msra.mxu0 0.0
    %1171 = vmatprep.subr.mxu0 0.0
    %1172 = vmatpush2.msra.mxu0 0.0
    %1173 = vmatprep.subr.mxu0 0.0
    %1174 = vmatpush2.msra.mxu0 0.0
    %1175 = vmatprep.subr.mxu0 0.0
    %1176 = vmatpush2.msra.mxu0 0.0
    %1177 = vmatprep.subr.mxu0 0.0
    %1178 = vmatpush2.msra.mxu0 0.0
    %1179 = vmatprep.subr.mxu0 0.0
    %1180 = vmatpush2.msra.mxu0 0.0
    %1181 = vmatprep.subr.mxu0 0.0
    %1182 = vmatpush2.msra.mxu0 0.0
    %1183 = vmatprep.subr.mxu0 0.0
    %1184 = vmatpush2.msra.mxu0 0.0
    %1185 = vmatprep.subr.mxu0 0.0
    %1186 = vmatpush2.msra.mxu0 0.0
    %1187 = vmatprep.subr.mxu0 0.0
    %1188 = vmatpush2.msra.mxu0 0.0
    %1189 = vmatprep.subr.mxu0 0.0
    %1190 = vmatpush2.msra.mxu0 0.0
    %1191 = vmatprep.subr.mxu0 0.0
    %1192 = vmatpush2.msra.mxu0 0.0
    %1193 = vmatprep.subr.mxu0 0.0
    %1194 = vmatpush2.msra.mxu0 0.0
    %1195 = vmatprep.subr.mxu0 0.0
    %1196 = vmatpush2.msra.mxu0 0.0
    %1197 = vmatprep.subr.mxu0 0.0
    %1198 = vmatpush2.msra.mxu0 0.0
    %1199 = vmatprep.subr.mxu0 0.0
    %1200 = vmatpush2.msra.mxu0 0.0
    %1201 = vmatprep.mubr.f32.mxu0 0.0
    %v1202 = vand.u32 %v865, 4294901760
    %1203 = vmatmul.mubr.f32.gmra.mxu0 %v1202
    %v1204 = vpop.f32.mrf.mxu0
    %v1205 = vadd.f32 %v984, %v1204
    %v1206 = vpop.f32.mrf.mxu0
    %1207 = vmatprep.mubr.f32.mxu0 0.0
    %v1208 = vand.u32 %v866, 4294901760
    %1209 = vmatmul.mubr.f32.gmra.mxu0 %v1208
    %v1210 = vpop.f32.mrf.mxu0
    %v1211 = vadd.f32 %v994, %v1210
    %v1212 = vpop.f32.mrf.mxu0
    %1213 = vmatprep.mubr.f32.mxu0 0.0
    %v1214 = vand.u32 %v867, 4294901760
    %1215 = vmatmul.mubr.f32.gmra.mxu0 %v1214
    %v1216 = vpop.f32.mrf.mxu0
    %v1217 = vadd.f32 %v1004, %v1216
    %v1218 = vpop.f32.mrf.mxu0
    %1219 = vmatprep.mubr.f32.mxu0 0.0
    %v1220 = vand.u32 %v868, 4294901760
    %1221 = vmatmul.mubr.f32.gmra.mxu0 %v1220
    %v1222 = vpop.f32.mrf.mxu0
    %v1223 = vadd.f32 %v1014, %v1222
    %v1224 = vpop.f32.mrf.mxu0
    %1225 = vmatprep.mubr.f32.mxu0 0.0
    %v1226 = vand.u32 %v869, 4294901760
    %1227 = vmatmul.mubr.f32.gmra.mxu0 %v1226
    %v1228 = vpop.f32.mrf.mxu0
    %v1229 = vadd.f32 %v1024, %v1228
    %v1230 = vpop.f32.mrf.mxu0
    %1231 = vmatprep.mubr.f32.mxu0 0.0
    %v1232 = vand.u32 %v870, 4294901760
    %1233 = vmatmul.mubr.f32.gmra.mxu0 %v1232
    %v1234 = vpop.f32.mrf.mxu0
    %v1235 = vadd.f32 %v1034, %v1234
    %v1236 = vpop.f32.mrf.mxu0
    %1237 = vmatprep.mubr.f32.mxu0 0.0
    %v1238 = vand.u32 %v871, 4294901760
    %1239 = vmatmul.mubr.f32.gmra.mxu0 %v1238
    %v1240 = vpop.f32.mrf.mxu0
    %v1241 = vadd.f32 %v1044, %v1240
    %v1242 = vpop.f32.mrf.mxu0
    %1243 = vmatprep.mubr.f32.mxu0 0.0
    %v1244 = vand.u32 %v872, 4294901760
    %1245 = vmatmul.mubr.f32.gmra.mxu0 %v1244
    %v1246 = vpop.f32.mrf.mxu0
    %v1247 = vadd.f32 %v1054, %v1246
    %v1248 = vpop.f32.mrf.mxu0
    %1249 = vdwg.mxu0
    %1250 = vmatprep.subr.mxu0 0.0
    %v1251 = vand.u32 %v888, 4294901760
    %v1252 = vsub.f32 %v888, %v1251
    %1253 = vmatpush1.msra.mxu0 %v1252
    %1254 = vmatprep.subr.mxu0 0.0
    %v1255 = vand.u32 %v887, 4294901760
    %v1256 = vsub.f32 %v887, %v1255
    %1257 = vmatpush1.msra.mxu0 %v1256
    %1258 = vmatprep.subr.mxu0 0.0
    %v1259 = vand.u32 %v886, 4294901760
    %v1260 = vsub.f32 %v886, %v1259
    %1261 = vmatpush1.msra.mxu0 %v1260
    %1262 = vmatprep.subr.mxu0 0.0
    %v1263 = vand.u32 %v885, 4294901760
    %v1264 = vsub.f32 %v885, %v1263
    %1265 = vmatpush1.msra.mxu0 %v1264
    %1266 = vmatprep.subr.mxu0 0.0
    %v1267 = vand.u32 %v884, 4294901760
    %v1268 = vsub.f32 %v884, %v1267
    %1269 = vmatpush1.msra.mxu0 %v1268
    %1270 = vmatprep.subr.mxu0 0.0
    %v1271 = vand.u32 %v883, 4294901760
    %v1272 = vsub.f32 %v883, %v1271
    %1273 = vmatpush1.msra.mxu0 %v1272
    %1274 = vmatprep.subr.mxu0 0.0
    %v1275 = vand.u32 %v882, 4294901760
    %v1276 = vsub.f32 %v882, %v1275
    %1277 = vmatpush1.msra.mxu0 %v1276
    %1278 = vmatprep.subr.mxu0 0.0
    %v1279 = vand.u32 %v881, 4294901760
    %v1280 = vsub.f32 %v881, %v1279
    %1281 = vmatpush1.msra.mxu0 %v1280
    %1282 = vmatprep.subr.mxu0 0.0
    %v1283 = vand.u32 %v880, 4294901760
    %v1284 = vsub.f32 %v880, %v1283
    %1285 = vmatpush1.msra.mxu0 %v1284
    %1286 = vmatprep.subr.mxu0 0.0
    %v1287 = vand.u32 %v879, 4294901760
    %v1288 = vsub.f32 %v879, %v1287
    %1289 = vmatpush1.msra.mxu0 %v1288
    %1290 = vmatprep.subr.mxu0 0.0
    %v1291 = vand.u32 %v878, 4294901760
    %v1292 = vsub.f32 %v878, %v1291
    %1293 = vmatpush1.msra.mxu0 %v1292
    %1294 = vmatprep.subr.mxu0 0.0
    %v1295 = vand.u32 %v877, 4294901760
    %v1296 = vsub.f32 %v877, %v1295
    %1297 = vmatpush1.msra.mxu0 %v1296
    %1298 = vmatprep.subr.mxu0 0.0
    %v1299 = vand.u32 %v876, 4294901760
    %v1300 = vsub.f32 %v876, %v1299
    %1301 = vmatpush1.msra.mxu0 %v1300
    %1302 = vmatprep.subr.mxu0 0.0
    %v1303 = vand.u32 %v875, 4294901760
    %v1304 = vsub.f32 %v875, %v1303
    %1305 = vmatpush1.msra.mxu0 %v1304
    %1306 = vmatprep.subr.mxu0 0.0
    %v1307 = vand.u32 %v874, 4294901760
    %v1308 = vsub.f32 %v874, %v1307
    %1309 = vmatpush1.msra.mxu0 %v1308
    %1310 = vmatprep.subr.mxu0 0.0
    %v1311 = vand.u32 %v873, 4294901760
    %v1312 = vsub.f32 %v873, %v1311
    %1313 = vmatpush1.msra.mxu0 %v1312
    %1314 = vmatprep.subr.mxu0 0.0
    %1315 = vmatpush2.msra.mxu0 0.0
    %1316 = vmatprep.subr.mxu0 0.0
    %1317 = vmatpush2.msra.mxu0 0.0
    %1318 = vmatprep.subr.mxu0 0.0
    %1319 = vmatpush2.msra.mxu0 0.0
    %1320 = vmatprep.subr.mxu0 0.0
    %1321 = vmatpush2.msra.mxu0 0.0
    %1322 = vmatprep.subr.mxu0 0.0
    %1323 = vmatpush2.msra.mxu0 0.0
    %1324 = vmatprep.subr.mxu0 0.0
    %1325 = vmatpush2.msra.mxu0 0.0
    %1326 = vmatprep.subr.mxu0 0.0
    %1327 = vmatpush2.msra.mxu0 0.0
    %1328 = vmatprep.subr.mxu0 0.0
    %1329 = vmatpush2.msra.mxu0 0.0
    %1330 = vmatprep.subr.mxu0 0.0
    %1331 = vmatpush2.msra.mxu0 0.0
    %1332 = vmatprep.subr.mxu0 0.0
    %1333 = vmatpush2.msra.mxu0 0.0
    %1334 = vmatprep.subr.mxu0 0.0
    %1335 = vmatpush2.msra.mxu0 0.0
    %1336 = vmatprep.subr.mxu0 0.0
    %1337 = vmatpush2.msra.mxu0 0.0
    %1338 = vmatprep.subr.mxu0 0.0
    %1339 = vmatpush2.msra.mxu0 0.0
    %1340 = vmatprep.subr.mxu0 0.0
    %1341 = vmatpush2.msra.mxu0 0.0
    %1342 = vmatprep.subr.mxu0 0.0
    %1343 = vmatpush2.msra.mxu0 0.0
    %1344 = vmatprep.subr.mxu0 0.0
    %1345 = vmatpush2.msra.mxu0 0.0
    %1346 = vmatprep.mubr.f32.mxu0 0.0
    %v1347 = vand.u32 %v865, 4294901760
    %v1348 = vsub.f32 %v865, %v1347
    %1349 = vmatmul.mubr.f32.gmra.mxu0 %v1348
    %v1350 = vpop.f32.mrf.mxu0
    %v1351 = vadd.f32 %v1205, %v1350
    %v1352 = vpop.f32.mrf.mxu0
    %1353 = vmatprep.mubr.f32.mxu0 0.0
    %v1354 = vand.u32 %v866, 4294901760
    %v1355 = vsub.f32 %v866, %v1354
    %1356 = vmatmul.mubr.f32.gmra.mxu0 %v1355
    %v1357 = vpop.f32.mrf.mxu0
    %v1358 = vadd.f32 %v1211, %v1357
    %v1359 = vpop.f32.mrf.mxu0
    %1360 = vmatprep.mubr.f32.mxu0 0.0
    %v1361 = vand.u32 %v867, 4294901760
    %v1362 = vsub.f32 %v867, %v1361
    %1363 = vmatmul.mubr.f32.gmra.mxu0 %v1362
    %v1364 = vpop.f32.mrf.mxu0
    %v1365 = vadd.f32 %v1217, %v1364
    %v1366 = vpop.f32.mrf.mxu0
    %1367 = vmatprep.mubr.f32.mxu0 0.0
    %v1368 = vand.u32 %v868, 4294901760
    %v1369 = vsub.f32 %v868, %v1368
    %1370 = vmatmul.mubr.f32.gmra.mxu0 %v1369
    %v1371 = vpop.f32.mrf.mxu0
    %v1372 = vadd.f32 %v1223, %v1371
    %v1373 = vpop.f32.mrf.mxu0
    %1374 = vmatprep.mubr.f32.mxu0 0.0
    %v1375 = vand.u32 %v869, 4294901760
    %v1376 = vsub.f32 %v869, %v1375
    %1377 = vmatmul.mubr.f32.gmra.mxu0 %v1376
    %v1378 = vpop.f32.mrf.mxu0
    %v1379 = vadd.f32 %v1229, %v1378
    %v1380 = vpop.f32.mrf.mxu0
    %1381 = vmatprep.mubr.f32.mxu0 0.0
    %v1382 = vand.u32 %v870, 4294901760
    %v1383 = vsub.f32 %v870, %v1382
    %1384 = vmatmul.mubr.f32.gmra.mxu0 %v1383
    %v1385 = vpop.f32.mrf.mxu0
    %v1386 = vadd.f32 %v1235, %v1385
    %v1387 = vpop.f32.mrf.mxu0
    %1388 = vmatprep.mubr.f32.mxu0 0.0
    %v1389 = vand.u32 %v871, 4294901760
    %v1390 = vsub.f32 %v871, %v1389
    %1391 = vmatmul.mubr.f32.gmra.mxu0 %v1390
    %v1392 = vpop.f32.mrf.mxu0
    %v1393 = vadd.f32 %v1241, %v1392
    %v1394 = vpop.f32.mrf.mxu0
    %1395 = vmatprep.mubr.f32.mxu0 0.0
    %v1396 = vand.u32 %v872, 4294901760
    %v1397 = vsub.f32 %v872, %v1396
    %1398 = vmatmul.mubr.f32.gmra.mxu0 %v1397
    %v1399 = vpop.f32.mrf.mxu0
    %v1400 = vadd.f32 %v1247, %v1399
    %v1401 = vpop.f32.mrf.mxu0
    %1402 = vdwg.mxu0
    %1403 = vmatprep.subr.mxu0 0.0
    %v1404 = vand.u32 %v888, 4294901760
    %1405 = vmatpush1.msra.mxu0 %v1404
    %1406 = vmatprep.subr.mxu0 0.0
    %v1407 = vand.u32 %v887, 4294901760
    %1408 = vmatpush1.msra.mxu0 %v1407
    %1409 = vmatprep.subr.mxu0 0.0
    %v1410 = vand.u32 %v886, 4294901760
    %1411 = vmatpush1.msra.mxu0 %v1410
    %1412 = vmatprep.subr.mxu0 0.0
    %v1413 = vand.u32 %v885, 4294901760
    %1414 = vmatpush1.msra.mxu0 %v1413
    %1415 = vmatprep.subr.mxu0 0.0
    %v1416 = vand.u32 %v884, 4294901760
    %1417 = vmatpush1.msra.mxu0 %v1416
    %1418 = vmatprep.subr.mxu0 0.0
    %v1419 = vand.u32 %v883, 4294901760
    %1420 = vmatpush1.msra.mxu0 %v1419
    %1421 = vmatprep.subr.mxu0 0.0
    %v1422 = vand.u32 %v882, 4294901760
    %1423 = vmatpush1.msra.mxu0 %v1422
    %1424 = vmatprep.subr.mxu0 0.0
    %v1425 = vand.u32 %v881, 4294901760
    %1426 = vmatpush1.msra.mxu0 %v1425
    %1427 = vmatprep.subr.mxu0 0.0
    %v1428 = vand.u32 %v880, 4294901760
    %1429 = vmatpush1.msra.mxu0 %v1428
    %1430 = vmatprep.subr.mxu0 0.0
    %v1431 = vand.u32 %v879, 4294901760
    %1432 = vmatpush1.msra.mxu0 %v1431
    %1433 = vmatprep.subr.mxu0 0.0
    %v1434 = vand.u32 %v878, 4294901760
    %1435 = vmatpush1.msra.mxu0 %v1434
    %1436 = vmatprep.subr.mxu0 0.0
    %v1437 = vand.u32 %v877, 4294901760
    %1438 = vmatpush1.msra.mxu0 %v1437
    %1439 = vmatprep.subr.mxu0 0.0
    %v1440 = vand.u32 %v876, 4294901760
    %1441 = vmatpush1.msra.mxu0 %v1440
    %1442 = vmatprep.subr.mxu0 0.0
    %v1443 = vand.u32 %v875, 4294901760
    %1444 = vmatpush1.msra.mxu0 %v1443
    %1445 = vmatprep.subr.mxu0 0.0
    %v1446 = vand.u32 %v874, 4294901760
    %1447 = vmatpush1.msra.mxu0 %v1446
    %1448 = vmatprep.subr.mxu0 0.0
    %v1449 = vand.u32 %v873, 4294901760
    %1450 = vmatpush1.msra.mxu0 %v1449
    %1451 = vmatprep.subr.mxu0 0.0
    %1452 = vmatpush2.msra.mxu0 0.0
    %1453 = vmatprep.subr.mxu0 0.0
    %1454 = vmatpush2.msra.mxu0 0.0
    %1455 = vmatprep.subr.mxu0 0.0
    %1456 = vmatpush2.msra.mxu0 0.0
    %1457 = vmatprep.subr.mxu0 0.0
    %1458 = vmatpush2.msra.mxu0 0.0
    %1459 = vmatprep.subr.mxu0 0.0
    %1460 = vmatpush2.msra.mxu0 0.0
    %1461 = vmatprep.subr.mxu0 0.0
    %1462 = vmatpush2.msra.mxu0 0.0
    %1463 = vmatprep.subr.mxu0 0.0
    %1464 = vmatpush2.msra.mxu0 0.0
    %1465 = vmatprep.subr.mxu0 0.0
    %1466 = vmatpush2.msra.mxu0 0.0
    %1467 = vmatprep.subr.mxu0 0.0
    %1468 = vmatpush2.msra.mxu0 0.0
    %1469 = vmatprep.subr.mxu0 0.0
    %1470 = vmatpush2.msra.mxu0 0.0
    %1471 = vmatprep.subr.mxu0 0.0
    %1472 = vmatpush2.msra.mxu0 0.0
    %1473 = vmatprep.subr.mxu0 0.0
    %1474 = vmatpush2.msra.mxu0 0.0
    %1475 = vmatprep.subr.mxu0 0.0
    %1476 = vmatpush2.msra.mxu0 0.0
    %1477 = vmatprep.subr.mxu0 0.0
    %1478 = vmatpush2.msra.mxu0 0.0
    %1479 = vmatprep.subr.mxu0 0.0
    %1480 = vmatpush2.msra.mxu0 0.0
    %1481 = vmatprep.subr.mxu0 0.0
    %1482 = vmatpush2.msra.mxu0 0.0
    %1483 = vmatprep.mubr.f32.mxu0 0.0
    %v1484 = vand.u32 %v865, 4294901760
    %v1485 = vsub.f32 %v865, %v1484
    %v1486 = vand.u32 %v1485, 4294901760
    %1487 = vmatmul.mubr.f32.gmra.mxu0 %v1486
    %v1488 = vpop.f32.mrf.mxu0
    %v1489 = vadd.f32 %v1351, %v1488
    %v1490 = vpop.f32.mrf.mxu0
    %1491 = vmatprep.mubr.f32.mxu0 0.0
    %v1492 = vand.u32 %v866, 4294901760
    %v1493 = vsub.f32 %v866, %v1492
    %v1494 = vand.u32 %v1493, 4294901760
    %1495 = vmatmul.mubr.f32.gmra.mxu0 %v1494
    %v1496 = vpop.f32.mrf.mxu0
    %v1497 = vadd.f32 %v1358, %v1496
    %v1498 = vpop.f32.mrf.mxu0
    %1499 = vmatprep.mubr.f32.mxu0 0.0
    %v1500 = vand.u32 %v867, 4294901760
    %v1501 = vsub.f32 %v867, %v1500
    %v1502 = vand.u32 %v1501, 4294901760
    %1503 = vmatmul.mubr.f32.gmra.mxu0 %v1502
    %v1504 = vpop.f32.mrf.mxu0
    %v1505 = vadd.f32 %v1365, %v1504
    %v1506 = vpop.f32.mrf.mxu0
    %1507 = vmatprep.mubr.f32.mxu0 0.0
    %v1508 = vand.u32 %v868, 4294901760
    %v1509 = vsub.f32 %v868, %v1508
    %v1510 = vand.u32 %v1509, 4294901760
    %1511 = vmatmul.mubr.f32.gmra.mxu0 %v1510
    %v1512 = vpop.f32.mrf.mxu0
    %v1513 = vadd.f32 %v1372, %v1512
    %v1514 = vpop.f32.mrf.mxu0
    %1515 = vmatprep.mubr.f32.mxu0 0.0
    %v1516 = vand.u32 %v869, 4294901760
    %v1517 = vsub.f32 %v869, %v1516
    %v1518 = vand.u32 %v1517, 4294901760
    %1519 = vmatmul.mubr.f32.gmra.mxu0 %v1518
    %v1520 = vpop.f32.mrf.mxu0
    %v1521 = vadd.f32 %v1379, %v1520
    %v1522 = vpop.f32.mrf.mxu0
    %1523 = vmatprep.mubr.f32.mxu0 0.0
    %v1524 = vand.u32 %v870, 4294901760
    %v1525 = vsub.f32 %v870, %v1524
    %v1526 = vand.u32 %v1525, 4294901760
    %1527 = vmatmul.mubr.f32.gmra.mxu0 %v1526
    %v1528 = vpop.f32.mrf.mxu0
    %v1529 = vadd.f32 %v1386, %v1528
    %v1530 = vpop.f32.mrf.mxu0
    %1531 = vmatprep.mubr.f32.mxu0 0.0
    %v1532 = vand.u32 %v871, 4294901760
    %v1533 = vsub.f32 %v871, %v1532
    %v1534 = vand.u32 %v1533, 4294901760
    %1535 = vmatmul.mubr.f32.gmra.mxu0 %v1534
    %v1536 = vpop.f32.mrf.mxu0
    %v1537 = vadd.f32 %v1393, %v1536
    %v1538 = vpop.f32.mrf.mxu0
    %1539 = vmatprep.mubr.f32.mxu0 0.0
    %v1540 = vand.u32 %v872, 4294901760
    %v1541 = vsub.f32 %v872, %v1540
    %v1542 = vand.u32 %v1541, 4294901760
    %1543 = vmatmul.mubr.f32.gmra.mxu0 %v1542
    %v1544 = vpop.f32.mrf.mxu0
    %v1545 = vadd.f32 %v1400, %v1544
    %v1546 = vpop.f32.mrf.mxu0
    %1547 = vdwg.mxu0
    %1548 = vmatprep.subr.mxu0 0.0
    %v1549 = vand.u32 %v888, 4294901760
    %v1550 = vsub.f32 %v888, %v1549
    %v1551 = vand.u32 %v1550, 4294901760
    %1552 = vmatpush1.msra.mxu0 %v1551
    %1553 = vmatprep.subr.mxu0 0.0
    %v1554 = vand.u32 %v887, 4294901760
    %v1555 = vsub.f32 %v887, %v1554
    %v1556 = vand.u32 %v1555, 4294901760
    %1557 = vmatpush1.msra.mxu0 %v1556
    %1558 = vmatprep.subr.mxu0 0.0
    %v1559 = vand.u32 %v886, 4294901760
    %v1560 = vsub.f32 %v886, %v1559
    %v1561 = vand.u32 %v1560, 4294901760
    %1562 = vmatpush1.msra.mxu0 %v1561
    %1563 = vmatprep.subr.mxu0 0.0
    %v1564 = vand.u32 %v885, 4294901760
    %v1565 = vsub.f32 %v885, %v1564
    %v1566 = vand.u32 %v1565, 4294901760
    %1567 = vmatpush1.msra.mxu0 %v1566
    %1568 = vmatprep.subr.mxu0 0.0
    %v1569 = vand.u32 %v884, 4294901760
    %v1570 = vsub.f32 %v884, %v1569
    %v1571 = vand.u32 %v1570, 4294901760
    %1572 = vmatpush1.msra.mxu0 %v1571
    %1573 = vmatprep.subr.mxu0 0.0
    %v1574 = vand.u32 %v883, 4294901760
    %v1575 = vsub.f32 %v883, %v1574
    %v1576 = vand.u32 %v1575, 4294901760
    %1577 = vmatpush1.msra.mxu0 %v1576
    %1578 = vmatprep.subr.mxu0 0.0
    %v1579 = vand.u32 %v882, 4294901760
    %v1580 = vsub.f32 %v882, %v1579
    %v1581 = vand.u32 %v1580, 4294901760
    %1582 = vmatpush1.msra.mxu0 %v1581
    %1583 = vmatprep.subr.mxu0 0.0
    %v1584 = vand.u32 %v881, 4294901760
    %v1585 = vsub.f32 %v881, %v1584
    %v1586 = vand.u32 %v1585, 4294901760
    %1587 = vmatpush1.msra.mxu0 %v1586
    %1588 = vmatprep.subr.mxu0 0.0
    %v1589 = vand.u32 %v880, 4294901760
    %v1590 = vsub.f32 %v880, %v1589
    %v1591 = vand.u32 %v1590, 4294901760
    %1592 = vmatpush1.msra.mxu0 %v1591
    %1593 = vmatprep.subr.mxu0 0.0
    %v1594 = vand.u32 %v879, 4294901760
    %v1595 = vsub.f32 %v879, %v1594
    %v1596 = vand.u32 %v1595, 4294901760
    %1597 = vmatpush1.msra.mxu0 %v1596
    %1598 = vmatprep.subr.mxu0 0.0
    %v1599 = vand.u32 %v878, 4294901760
    %v1600 = vsub.f32 %v878, %v1599
    %v1601 = vand.u32 %v1600, 4294901760
    %1602 = vmatpush1.msra.mxu0 %v1601
    %1603 = vmatprep.subr.mxu0 0.0
    %v1604 = vand.u32 %v877, 4294901760
    %v1605 = vsub.f32 %v877, %v1604
    %v1606 = vand.u32 %v1605, 4294901760
    %1607 = vmatpush1.msra.mxu0 %v1606
    %1608 = vmatprep.subr.mxu0 0.0
    %v1609 = vand.u32 %v876, 4294901760
    %v1610 = vsub.f32 %v876, %v1609
    %v1611 = vand.u32 %v1610, 4294901760
    %1612 = vmatpush1.msra.mxu0 %v1611
    %1613 = vmatprep.subr.mxu0 0.0
    %v1614 = vand.u32 %v875, 4294901760
    %v1615 = vsub.f32 %v875, %v1614
    %v1616 = vand.u32 %v1615, 4294901760
    %1617 = vmatpush1.msra.mxu0 %v1616
    %1618 = vmatprep.subr.mxu0 0.0
    %v1619 = vand.u32 %v874, 4294901760
    %v1620 = vsub.f32 %v874, %v1619
    %v1621 = vand.u32 %v1620, 4294901760
    %1622 = vmatpush1.msra.mxu0 %v1621
    %1623 = vmatprep.subr.mxu0 0.0
    %v1624 = vand.u32 %v873, 4294901760
    %v1625 = vsub.f32 %v873, %v1624
    %v1626 = vand.u32 %v1625, 4294901760
    %1627 = vmatpush1.msra.mxu0 %v1626
    %1628 = vmatprep.subr.mxu0 0.0
    %1629 = vmatpush2.msra.mxu0 0.0
    %1630 = vmatprep.subr.mxu0 0.0
    %1631 = vmatpush2.msra.mxu0 0.0
    %1632 = vmatprep.subr.mxu0 0.0
    %1633 = vmatpush2.msra.mxu0 0.0
    %1634 = vmatprep.subr.mxu0 0.0
    %1635 = vmatpush2.msra.mxu0 0.0
    %1636 = vmatprep.subr.mxu0 0.0
    %1637 = vmatpush2.msra.mxu0 0.0
    %1638 = vmatprep.subr.mxu0 0.0
    %1639 = vmatpush2.msra.mxu0 0.0
    %1640 = vmatprep.subr.mxu0 0.0
    %1641 = vmatpush2.msra.mxu0 0.0
    %1642 = vmatprep.subr.mxu0 0.0
    %1643 = vmatpush2.msra.mxu0 0.0
    %1644 = vmatprep.subr.mxu0 0.0
    %1645 = vmatpush2.msra.mxu0 0.0
    %1646 = vmatprep.subr.mxu0 0.0
    %1647 = vmatpush2.msra.mxu0 0.0
    %1648 = vmatprep.subr.mxu0 0.0
    %1649 = vmatpush2.msra.mxu0 0.0
    %1650 = vmatprep.subr.mxu0 0.0
    %1651 = vmatpush2.msra.mxu0 0.0
    %1652 = vmatprep.subr.mxu0 0.0
    %1653 = vmatpush2.msra.mxu0 0.0
    %1654 = vmatprep.subr.mxu0 0.0
    %1655 = vmatpush2.msra.mxu0 0.0
    %1656 = vmatprep.subr.mxu0 0.0
    %1657 = vmatpush2.msra.mxu0 0.0
    %1658 = vmatprep.subr.mxu0 0.0
    %1659 = vmatpush2.msra.mxu0 0.0
    %1660 = vmatprep.mubr.f32.mxu0 0.0
    %v1661 = vand.u32 %v865, 4294901760
    %1662 = vmatmul.mubr.f32.gmra.mxu0 %v1661
    %v1663 = vpop.f32.mrf.mxu0
    %v1664 = vadd.f32 %v1489, %v1663
    %v1665 = vpop.f32.mrf.mxu0
    %1666 = vmatprep.mubr.f32.mxu0 0.0
    %v1667 = vand.u32 %v866, 4294901760
    %1668 = vmatmul.mubr.f32.gmra.mxu0 %v1667
    %v1669 = vpop.f32.mrf.mxu0
    %v1670 = vadd.f32 %v1497, %v1669
    %v1671 = vpop.f32.mrf.mxu0
    %1672 = vmatprep.mubr.f32.mxu0 0.0
    %v1673 = vand.u32 %v867, 4294901760
    %1674 = vmatmul.mubr.f32.gmra.mxu0 %v1673
    %v1675 = vpop.f32.mrf.mxu0
    %v1676 = vadd.f32 %v1505, %v1675
    %v1677 = vpop.f32.mrf.mxu0
    %1678 = vmatprep.mubr.f32.mxu0 0.0
    %v1679 = vand.u32 %v868, 4294901760
    %1680 = vmatmul.mubr.f32.gmra.mxu0 %v1679
    %v1681 = vpop.f32.mrf.mxu0
    %v1682 = vadd.f32 %v1513, %v1681
    %v1683 = vpop.f32.mrf.mxu0
    %1684 = vmatprep.mubr.f32.mxu0 0.0
    %v1685 = vand.u32 %v869, 4294901760
    %1686 = vmatmul.mubr.f32.gmra.mxu0 %v1685
    %v1687 = vpop.f32.mrf.mxu0
    %v1688 = vadd.f32 %v1521, %v1687
    %v1689 = vpop.f32.mrf.mxu0
    %1690 = vmatprep.mubr.f32.mxu0 0.0
    %v1691 = vand.u32 %v870, 4294901760
    %1692 = vmatmul.mubr.f32.gmra.mxu0 %v1691
    %v1693 = vpop.f32.mrf.mxu0
    %v1694 = vadd.f32 %v1529, %v1693
    %v1695 = vpop.f32.mrf.mxu0
    %1696 = vmatprep.mubr.f32.mxu0 0.0
    %v1697 = vand.u32 %v871, 4294901760
    %1698 = vmatmul.mubr.f32.gmra.mxu0 %v1697
    %v1699 = vpop.f32.mrf.mxu0
    %v1700 = vadd.f32 %v1537, %v1699
    %v1701 = vpop.f32.mrf.mxu0
    %1702 = vmatprep.mubr.f32.mxu0 0.0
    %v1703 = vand.u32 %v872, 4294901760
    %1704 = vmatmul.mubr.f32.gmra.mxu0 %v1703
    %v1705 = vpop.f32.mrf.mxu0
    %v1706 = vadd.f32 %v1545, %v1705
    %v1707 = vpop.f32.mrf.mxu0
    %1708 = vdwg.mxu0
    %1709 = vmatprep.subr.mxu0 0.0
    %v1710 = vand.u32 %v888, 4294901760
    %1711 = vmatpush1.msra.mxu0 %v1710
    %1712 = vmatprep.subr.mxu0 0.0
    %v1713 = vand.u32 %v887, 4294901760
    %1714 = vmatpush1.msra.mxu0 %v1713
    %1715 = vmatprep.subr.mxu0 0.0
    %v1716 = vand.u32 %v886, 4294901760
    %1717 = vmatpush1.msra.mxu0 %v1716
    %1718 = vmatprep.subr.mxu0 0.0
    %v1719 = vand.u32 %v885, 4294901760
    %1720 = vmatpush1.msra.mxu0 %v1719
    %1721 = vmatprep.subr.mxu0 0.0
    %v1722 = vand.u32 %v884, 4294901760
    %1723 = vmatpush1.msra.mxu0 %v1722
    %1724 = vmatprep.subr.mxu0 0.0
    %v1725 = vand.u32 %v883, 4294901760
    %1726 = vmatpush1.msra.mxu0 %v1725
    %1727 = vmatprep.subr.mxu0 0.0
    %v1728 = vand.u32 %v882, 4294901760
    %1729 = vmatpush1.msra.mxu0 %v1728
    %1730 = vmatprep.subr.mxu0 0.0
    %v1731 = vand.u32 %v881, 4294901760
    %1732 = vmatpush1.msra.mxu0 %v1731
    %1733 = vmatprep.subr.mxu0 0.0
    %v1734 = vand.u32 %v880, 4294901760
    %1735 = vmatpush1.msra.mxu0 %v1734
    %1736 = vmatprep.subr.mxu0 0.0
    %v1737 = vand.u32 %v879, 4294901760
    %1738 = vmatpush1.msra.mxu0 %v1737
    %1739 = vmatprep.subr.mxu0 0.0
    %v1740 = vand.u32 %v878, 4294901760
    %1741 = vmatpush1.msra.mxu0 %v1740
    %1742 = vmatprep.subr.mxu0 0.0
    %v1743 = vand.u32 %v877, 4294901760
    %1744 = vmatpush1.msra.mxu0 %v1743
    %1745 = vmatprep.subr.mxu0 0.0
    %v1746 = vand.u32 %v876, 4294901760
    %1747 = vmatpush1.msra.mxu0 %v1746
    %1748 = vmatprep.subr.mxu0 0.0
    %v1749 = vand.u32 %v875, 4294901760
    %1750 = vmatpush1.msra.mxu0 %v1749
    %1751 = vmatprep.subr.mxu0 0.0
    %v1752 = vand.u32 %v874, 4294901760
    %1753 = vmatpush1.msra.mxu0 %v1752
    %1754 = vmatprep.subr.mxu0 0.0
    %v1755 = vand.u32 %v873, 4294901760
    %1756 = vmatpush1.msra.mxu0 %v1755
    %1757 = vmatprep.subr.mxu0 0.0
    %1758 = vmatpush2.msra.mxu0 0.0
    %1759 = vmatprep.subr.mxu0 0.0
    %1760 = vmatpush2.msra.mxu0 0.0
    %1761 = vmatprep.subr.mxu0 0.0
    %1762 = vmatpush2.msra.mxu0 0.0
    %1763 = vmatprep.subr.mxu0 0.0
    %1764 = vmatpush2.msra.mxu0 0.0
    %1765 = vmatprep.subr.mxu0 0.0
    %1766 = vmatpush2.msra.mxu0 0.0
    %1767 = vmatprep.subr.mxu0 0.0
    %1768 = vmatpush2.msra.mxu0 0.0
    %1769 = vmatprep.subr.mxu0 0.0
    %1770 = vmatpush2.msra.mxu0 0.0
    %1771 = vmatprep.subr.mxu0 0.0
    %1772 = vmatpush2.msra.mxu0 0.0
    %1773 = vmatprep.subr.mxu0 0.0
    %1774 = vmatpush2.msra.mxu0 0.0
    %1775 = vmatprep.subr.mxu0 0.0
    %1776 = vmatpush2.msra.mxu0 0.0
    %1777 = vmatprep.subr.mxu0 0.0
    %1778 = vmatpush2.msra.mxu0 0.0
    %1779 = vmatprep.subr.mxu0 0.0
    %1780 = vmatpush2.msra.mxu0 0.0
    %1781 = vmatprep.subr.mxu0 0.0
    %1782 = vmatpush2.msra.mxu0 0.0
    %1783 = vmatprep.subr.mxu0 0.0
    %1784 = vmatpush2.msra.mxu0 0.0
    %1785 = vmatprep.subr.mxu0 0.0
    %1786 = vmatpush2.msra.mxu0 0.0
    %1787 = vmatprep.subr.mxu0 0.0
    %1788 = vmatpush2.msra.mxu0 0.0
    %1789 = vmatprep.mubr.f32.mxu0 0.0
    %v1790 = vand.u32 %v865, 4294901760
    %1791 = vmatmul.mubr.f32.gmra.mxu0 %v1790
    %v1792 = vpop.f32.mrf.mxu0
    %v1793 = vadd.f32 %v1664, %v1792
    %v1794 = vpop.f32.mrf.mxu0
    %1795 = vmatprep.mubr.f32.mxu0 0.0
    %v1796 = vand.u32 %v866, 4294901760
    %1797 = vmatmul.mubr.f32.gmra.mxu0 %v1796
    %v1798 = vpop.f32.mrf.mxu0
    %v1799 = vadd.f32 %v1670, %v1798
    %v1800 = vpop.f32.mrf.mxu0
    %1801 = vmatprep.mubr.f32.mxu0 0.0
    %v1802 = vand.u32 %v867, 4294901760
    %1803 = vmatmul.mubr.f32.gmra.mxu0 %v1802
    %v1804 = vpop.f32.mrf.mxu0
    %v1805 = vadd.f32 %v1676, %v1804
    %v1806 = vpop.f32.mrf.mxu0
    %1807 = vmatprep.mubr.f32.mxu0 0.0
    %v1808 = vand.u32 %v868, 4294901760
    %1809 = vmatmul.mubr.f32.gmra.mxu0 %v1808
    %v1810 = vpop.f32.mrf.mxu0
    %v1811 = vadd.f32 %v1682, %v1810
    %v1812 = vpop.f32.mrf.mxu0
    %1813 = vmatprep.mubr.f32.mxu0 0.0
    %v1814 = vand.u32 %v869, 4294901760
    %1815 = vmatmul.mubr.f32.gmra.mxu0 %v1814
    %v1816 = vpop.f32.mrf.mxu0
    %v1817 = vadd.f32 %v1688, %v1816
    %v1818 = vpop.f32.mrf.mxu0
    %1819 = vmatprep.mubr.f32.mxu0 0.0
    %v1820 = vand.u32 %v870, 4294901760
    %1821 = vmatmul.mubr.f32.gmra.mxu0 %v1820
    %v1822 = vpop.f32.mrf.mxu0
    %v1823 = vadd.f32 %v1694, %v1822
    %v1824 = vpop.f32.mrf.mxu0
    %1825 = vmatprep.mubr.f32.mxu0 0.0
    %v1826 = vand.u32 %v871, 4294901760
    %1827 = vmatmul.mubr.f32.gmra.mxu0 %v1826
    %v1828 = vpop.f32.mrf.mxu0
    %v1829 = vadd.f32 %v1700, %v1828
    %v1830 = vpop.f32.mrf.mxu0
    %1831 = vmatprep.mubr.f32.mxu0 0.0
    %v1832 = vand.u32 %v872, 4294901760
    %1833 = vmatmul.mubr.f32.gmra.mxu0 %v1832
    %v1834 = vpop.f32.mrf.mxu0
    %v1835 = vadd.f32 %v1706, %v1834
    %v1836 = vpop.f32.mrf.mxu0
    %1837 = vdwg.mxu0
    %v1838 = vlaneseq
    %v1839 = vand.u32 %v1838, 127
    %vm1840 = vcmp.lt.s32.totalorder %v1839, 0
    %v1841 = vsub.s32 0, %v1839
    %v1842 = vsel %vm1840, %v1841, %v1839
    %v1843 = vshrl.u32 %v1842, 4
    %v1844 = vand.u32 %v1842, 15
    %v1845 = vsub.s32 0, %v1844
    %v1846 = vsel %vm1840, %v1845, %v1844
    %vm1847 = vcmp.ne.s32.totalorder %v1846, 0
    %vm1848 = vcmp.lt.s32.totalorder %v1846, 0
    %vm1849 = vmand %vm1848, %vm1847
    %v1850 = vadd.s32 %v1846, 16
    %v1851 = vsel %vm1849, %v1850, %v1846
    %vm1852 = vcmp.lt.s32.totalorder %v1851, 8
    %v1853 = vtanh.pop %v1793
    %v1854 = vtanh.pop %v1799
    %v1855 = vtanh.pop %v1805
    %v1856 = vtanh.pop %v1811
    %v1857 = vtanh.pop %v1817
    %v1858 = vtanh.pop %v1823
    %v1859 = vtanh.pop %v1829
    %v1860 = vtanh.pop %v1835
    %v1861 = vmax.f32 %v1793, 0.0
    %v1862 = vmax.f32 %v1799, 0.0
    %v1863 = vmax.f32 %v1805, 0.0
    %v1864 = vmax.f32 %v1811, 0.0
    %v1865 = vmax.f32 %v1817, 0.0
    %v1866 = vmax.f32 %v1823, 0.0
    %v1867 = vmax.f32 %v1829, 0.0
    %v1868 = vmax.f32 %v1835, 0.0
    %v1869 = vand.u32 2147483647, %v1793
    %v1870 = vand.u32 2147483647, %v1799
    %v1871 = vand.u32 2147483647, %v1805
    %v1872 = vand.u32 2147483647, %v1811
    %v1873 = vand.u32 2147483647, %v1817
    %v1874 = vand.u32 2147483647, %v1823
    %v1875 = vand.u32 2147483647, %v1829
    %v1876 = vand.u32 2147483647, %v1835
    %v1877 = vsub.f32 0.0, %v1869
    %v1878 = vsub.f32 0.0, %v1870
    %v1879 = vsub.f32 0.0, %v1871
    %v1880 = vsub.f32 0.0, %v1872
    %v1881 = vsub.f32 0.0, %v1873
    %v1882 = vsub.f32 0.0, %v1874
    %v1883 = vsub.f32 0.0, %v1875
    %v1884 = vsub.f32 0.0, %v1876
    %v1885 = vmul.f32 %v1877, 1.442695
    %v1886 = vpow.pop %v1885
    %v1887 = vmul.f32 %v1878, 1.442695
    %v1888 = vpow.pop %v1887
    %v1889 = vmul.f32 %v1879, 1.442695
    %v1890 = vpow.pop %v1889
    %v1891 = vmul.f32 %v1880, 1.442695
    %v1892 = vpow.pop %v1891
    %v1893 = vmul.f32 %v1881, 1.442695
    %v1894 = vpow.pop %v1893
    %v1895 = vmul.f32 %v1882, 1.442695
    %v1896 = vpow.pop %v1895
    %v1897 = vmul.f32 %v1883, 1.442695
    %v1898 = vpow.pop %v1897
    %v1899 = vmul.f32 %v1884, 1.442695
    %v1900 = vpow.pop %v1899
    %v1901 = vadd.f32 %v1886, 1.0
    %v1902 = vlog2.pop %v1901
    %v1903 = vmul.f32 %v1902, 0.6931472
    %v1904 = vmul.f32 -0.5, %v1886
    %v1905 = vadd.f32 %v1904, 1.0
    %v1906 = vmul.f32 %v1905, %v1886
    %v1907 = vand.u32 2147483647, %v1886
    %vm1908 = vcmp.lt.f32.partialorder %v1907, 0.0004427343
    %v1909 = vsel %vm1908, %v1906, %v1903
    %v1910 = vadd.f32 %v1888, 1.0
    %v1911 = vlog2.pop %v1910
    %v1912 = vmul.f32 %v1911, 0.6931472
    %v1913 = vmul.f32 -0.5, %v1888
    %v1914 = vadd.f32 %v1913, 1.0
    %v1915 = vmul.f32 %v1914, %v1888
    %v1916 = vand.u32 2147483647, %v1888
    %vm1917 = vcmp.lt.f32.partialorder %v1916, 0.0004427343
    %v1918 = vsel %vm1917, %v1915, %v1912
    %v1919 = vadd.f32 %v1890, 1.0
    %v1920 = vlog2.pop %v1919
    %v1921 = vmul.f32 %v1920, 0.6931472
    %v1922 = vmul.f32 -0.5, %v1890
    %v1923 = vadd.f32 %v1922, 1.0
    %v1924 = vmul.f32 %v1923, %v1890
    %v1925 = vand.u32 2147483647, %v1890
    %vm1926 = vcmp.lt.f32.partialorder %v1925, 0.0004427343
    %v1927 = vsel %vm1926, %v1924, %v1921
    %v1928 = vadd.f32 %v1892, 1.0
    %v1929 = vlog2.pop %v1928
    %v1930 = vmul.f32 %v1929, 0.6931472
    %v1931 = vmul.f32 -0.5, %v1892
    %v1932 = vadd.f32 %v1931, 1.0
    %v1933 = vmul.f32 %v1932, %v1892
    %v1934 = vand.u32 2147483647, %v1892
    %vm1935 = vcmp.lt.f32.partialorder %v1934, 0.0004427343
    %v1936 = vsel %vm1935, %v1933, %v1930
    %v1937 = vadd.f32 %v1894, 1.0
    %v1938 = vlog2.pop %v1937
    %v1939 = vmul.f32 %v1938, 0.6931472
    %v1940 = vmul.f32 -0.5, %v1894
    %v1941 = vadd.f32 %v1940, 1.0
    %v1942 = vmul.f32 %v1941, %v1894
    %v1943 = vand.u32 2147483647, %v1894
    %vm1944 = vcmp.lt.f32.partialorder %v1943, 0.0004427343
    %v1945 = vsel %vm1944, %v1942, %v1939
    %v1946 = vadd.f32 %v1896, 1.0
    %v1947 = vlog2.pop %v1946
    %v1948 = vmul.f32 %v1947, 0.6931472
    %v1949 = vmul.f32 -0.5, %v1896
    %v1950 = vadd.f32 %v1949, 1.0
    %v1951 = vmul.f32 %v1950, %v1896
    %v1952 = vand.u32 2147483647, %v1896
    %vm1953 = vcmp.lt.f32.partialorder %v1952, 0.0004427343
    %v1954 = vsel %vm1953, %v1951, %v1948
    %v1955 = vadd.f32 %v1898, 1.0
    %v1956 = vlog2.pop %v1955
    %v1957 = vmul.f32 %v1956, 0.6931472
    %v1958 = vmul.f32 -0.5, %v1898
    %v1959 = vadd.f32 %v1958, 1.0
    %v1960 = vmul.f32 %v1959, %v1898
    %v1961 = vand.u32 2147483647, %v1898
    %vm1962 = vcmp.lt.f32.partialorder %v1961, 0.0004427343
    %v1963 = vsel %vm1962, %v1960, %v1957
    %v1964 = vadd.f32 %v1900, 1.0
    %v1965 = vlog2.pop %v1964
    %v1966 = vmul.f32 %v1965, 0.6931472
    %v1967 = vmul.f32 -0.5, %v1900
    %v1968 = vadd.f32 %v1967, 1.0
    %v1969 = vmul.f32 %v1968, %v1900
    %v1970 = vand.u32 2147483647, %v1900
    %vm1971 = vcmp.lt.f32.partialorder %v1970, 0.0004427343
    %v1972 = vsel %vm1971, %v1969, %v1966
    %v1973 = vadd.f32 %v1861, %v1909
    %v1974 = vadd.f32 %v1862, %v1918
    %v1975 = vadd.f32 %v1863, %v1927
    %v1976 = vadd.f32 %v1864, %v1936
    %v1977 = vadd.f32 %v1865, %v1945
    %v1978 = vadd.f32 %v1866, %v1954
    %v1979 = vadd.f32 %v1867, %v1963
    %v1980 = vadd.f32 %v1868, %v1972
    %v1981 = vadd.f32 %v1973, 1e-05
    %v1982 = vadd.f32 %v1974, 1e-05
    %v1983 = vadd.f32 %v1975, 1e-05
    %v1984 = vadd.f32 %v1976, 1e-05
    %v1985 = vadd.f32 %v1977, 1e-05
    %v1986 = vadd.f32 %v1978, 1e-05
    %v1987 = vadd.f32 %v1979, 1e-05
    %v1988 = vadd.f32 %v1980, 1e-05
    %v1989 = vsel %vm1852, %v1853, %v1981
    %v1990 = vsel %vm1852, %v1854, %v1982
    %v1991 = vsel %vm1852, %v1855, %v1983
    %v1992 = vsel %vm1852, %v1856, %v1984
    %v1993 = vsel %vm1852, %v1857, %v1985
    %v1994 = vsel %vm1852, %v1858, %v1986
    %v1995 = vsel %vm1852, %v1859, %v1987
    %v1996 = vsel %vm1852, %v1860, %v1988
    %vm1997 = vcmp.ge.s32.totalorder %v1839, 0
    %vm1998 = vcmp.lt.s32.totalorder %v1839, 16
    %vm1999 = vmand %vm1997, %vm1998
    %v2000 = vsel %vm1999, %v1989, 0.0
    %vm2001 = vcmp.ge.s32.totalorder %v1839, 16
    %vm2002 = vcmp.lt.s32.totalorder %v1839, 32
    %vm2003 = vmand %vm2001, %vm2002
    %v2004 = vsel %vm2003, %v1990, %v2000
    %vm2005 = vcmp.ge.s32.totalorder %v1839, 32
    %vm2006 = vcmp.lt.s32.totalorder %v1839, 48
    %vm2007 = vmand %vm2005, %vm2006
    %v2008 = vsel %vm2007, %v1991, %v2004
    %vm2009 = vcmp.ge.s32.totalorder %v1839, 48
    %vm2010 = vcmp.lt.s32.totalorder %v1839, 64
    %vm2011 = vmand %vm2009, %vm2010
    %v2012 = vsel %vm2011, %v1992, %v2008
    %vm2013 = vcmp.ge.s32.totalorder %v1839, 64
    %vm2014 = vcmp.lt.s32.totalorder %v1839, 80
    %vm2015 = vmand %vm2013, %vm2014
    %v2016 = vsel %vm2015, %v1993, %v2012
    %vm2017 = vcmp.ge.s32.totalorder %v1839, 80
    %vm2018 = vcmp.lt.s32.totalorder %v1839, 96
    %vm2019 = vmand %vm2017, %vm2018
    %v2020 = vsel %vm2019, %v1994, %v2016
    %vm2021 = vcmp.ge.s32.totalorder %v1839, 96
    %vm2022 = vcmp.lt.s32.totalorder %v1839, 112
    %vm2023 = vmand %vm2021, %vm2022
    %v2024 = vsel %vm2023, %v1995, %v2020
    %vm2025 = vcmp.ge.s32.totalorder %v1839, 112
    %vm2026 = vcmp.lt.s32.totalorder %v1839, 128
    %vm2027 = vmand %vm2025, %vm2026
    %v2028 = vsel %vm2027, %v1996, %v2024
    %2029 = vst [vmem:[#allocation5] sm:$0xff] %v2028
    // Predicated region
    $region26: #{tpu_custom_call.1} parent=1 // pred_check
      _
    $region27: #{tpu_custom_call.1} parent=1 // pred_check_branch
      %2031 = sbr.rel (0) target = $region29
    $region28: #{tpu_custom_call.1} parent=1 // pred_region
      %s2033 = ssub.s32 128, 128
      %2034 = vsyncadd [#allocation4], %s2033
      %s2036 = sshll.u32 [#allocation5], 4
      %s2037 = int_to_ptr.vmem [resolvable:$true] %s2036
      %2039 = dma.vmem_to_hbm [thread:$0]  %s2037, 128, %s5, [#allocation4]
    $region29: #{tpu_custom_call.1} parent=1 // pred_fallthru
      _
    // Predicated region
    $region30: #{tpu_custom_call.1} parent=1 // pred_check
      _
    $region31: #{tpu_custom_call.1} parent=1 // pred_check_branch
      %2041 = sbr.rel (0) target = $region33
    $region32: #{tpu_custom_call.1} parent=1 // pred_region
      %2042 = dma.done [#allocation4], 128
    $region33: #{tpu_custom_call.1} parent=1 // pred_fallthru
      _
    %2043 = vsyncpa [#allocation3], 1
    %2044 = vsyncpa [#allocation4], 1

</llo_original>
